<compile_context>
chip_gen: v5e
topology: v5e:2x2
jax: 0.10.0
libtpu: 0.0.40
codegen_flags: <defaults>
</compile_context>

<pallas_src>
import math
import jax
import jax.numpy as jnp
from jax.experimental import pallas as pl
from jax.experimental.pallas import tpu as pltpu


def _round_up(n: int, m: int) -> int:
    return ((n + m - 1) // m) * m


def _cdiv(a: int, b: int) -> int:
    return -(-a // b)


def _block_diag(w, p: int):
    # (din, dout) -> (din*p, dout*p) block-diagonal, built once in the wrapper.
    if p == 1:
        return w
    return jnp.kron(jnp.eye(p, dtype=w.dtype), w)


def mlp_kernel(x_ref, w1_ref, b1_ref, w2_ref, b2_ref, o_ref):
    # Fused (x @ W1 + b1) -> ReLU -> (@ W2 + b2); all operands resident in VMEM.
    # Both matmuls accumulate in f32 on the MXU; bias add + ReLU stay f32 on the VPU.
    h = jnp.dot(x_ref[...], w1_ref[...], preferred_element_type=jnp.float32)
    h = jnp.maximum(h + b1_ref[...], 0.0)                     # (tp, H*P) + (1, H*P)
    o = jnp.dot(h.astype(w2_ref.dtype), w2_ref[...],          # h cast to matmul dtype
                preferred_element_type=jnp.float32)
    o_ref[...] = (o + b2_ref[...]).astype(o_ref.dtype)        # (tp, Dout*P) + (1, Dout*P)


def mlp_pallas(x, w1, b1, w2, b2, *, tm=8192, pack=8,
               matmul_dtype=jnp.bfloat16, out_dtype=None):
    """MLP forward on the last axis of `x` (same semantics as the torch.nn.Linear stack).

    x:  [..., Din]      (any leading dims; flattened to rows internally)
    w1: [Din, H]   b1: [H]
    w2: [H, Dout]  b2: [Dout]
    tm:           row tile in ORIGINAL rows (default 8192).
    pack:         row-packing factor P (8 for v6e/v7x, 4 recommended on v5e, 1 disables).
    matmul_dtype: dtype of matmul operands (default bf16; accumulation always f32).
    out_dtype:    output dtype (default: x.dtype).
    """
    orig_shape = x.shape
    Din = orig_shape[-1]
    H = w1.shape[1]
    Dout = w2.shape[1]
    out_dtype = x.dtype if out_dtype is None else out_dtype

    x2 = x.reshape(-1, Din)
    N = x2.shape[0]

    md = jnp.dtype(matmul_dtype)
    x2 = x2.astype(md)
    w1c = w1.astype(md)
    w2c = w2.astype(md)

    # Sublane alignment for the matmul dtype: f32 -> 8, bf16 -> 16, 8-bit -> 32.
    align = 8 * (4 // md.itemsize)

    # Row packing: block-diagonal weights + tiled biases, built once outside the kernel.
    P = max(int(pack), 1)
    w1p = _block_diag(w1c, P)                                    # (Din*P, H*P)
    w2p = _block_diag(w2c, P)                                    # (H*P, Dout*P)
    b1p = jnp.tile(b1.astype(jnp.float32), P).reshape(1, H * P)
    b2p = jnp.tile(b2.astype(jnp.float32), P).reshape(1, Dout * P)

    Np = max(_cdiv(N, P), 1)                                     # packed rows

    # Packed-row tile: target `tm` original rows per step, aligned; cap at half the rows so the
    # "parallel" grid axis gives both v7x TensorCores work whenever there is enough of it.
    tp_target = max(_round_up(max(tm // P, 1), align), align)
    if Np > align:
        tp_half = _round_up(_cdiv(Np, 2), align)
        tp_eff = max(min(tp_target, tp_half), align)
    else:
        tp_eff = _round_up(Np, align)

    np_pad = _round_up(Np, tp_eff)
    total_rows = np_pad * P
    if total_rows != N:
        x2 = jnp.pad(x2, ((0, total_rows - N), (0, 0)))
    xp = x2.reshape(np_pad, Din * P)                             # lane-dense packed rows
    grid = (np_pad // tp_eff,)

    out_itemsize = jnp.dtype(out_dtype).itemsize
    cost = pl.CostEstimate(
        flops=int(2 * np_pad * ((Din * P) * (H * P) + (H * P) * (Dout * P))),
        transcendentals=0,
        bytes_accessed=int(xp.size * md.itemsize
                           + w1p.size * md.itemsize + w2p.size * md.itemsize
                           + b1p.size * 4 + b2p.size * 4
                           + np_pad * Dout * P * out_itemsize),
    )

    # Rough VMEM footprint: double-buffered x/out tiles + resident weights + h scratch (f32 + md).
    est = (2 * tp_eff * Din * P * md.itemsize
           + 2 * tp_eff * Dout * P * out_itemsize
           + 2 * (w1p.size + w2p.size) * md.itemsize
           + 2 * (b1p.size + b2p.size) * 4
           + tp_eff * H * P * (4 + md.itemsize)
           + tp_eff * Dout * P * 4)
    vmem_limit = int(min(max(2 * est, 32 << 20), 60 << 20))

    out = pl.pallas_call(
        mlp_kernel,
        out_shape=jax.ShapeDtypeStruct((np_pad, Dout * P), out_dtype),
        grid_spec=pltpu.PrefetchScalarGridSpec(
            num_scalar_prefetch=0,
            grid=grid,
            in_specs=[
                pl.BlockSpec((tp_eff, Din * P), lambda i: (i, 0)),   # x: tile over packed rows
                pl.BlockSpec((Din * P, H * P), lambda i: (0, 0)),    # W1': VMEM-resident
                pl.BlockSpec((1, H * P), lambda i: (0, 0)),          # b1'
                pl.BlockSpec((H * P, Dout * P), lambda i: (0, 0)),   # W2': VMEM-resident
                pl.BlockSpec((1, Dout * P), lambda i: (0, 0)),       # b2'
            ],
            out_specs=pl.BlockSpec((tp_eff, Dout * P), lambda i: (i, 0)),
        ),
        compiler_params=pltpu.CompilerParams(
            dimension_semantics=("parallel",),
            vmem_limit_bytes=vmem_limit,
        ),
        cost_estimate=cost,
    )(xp, w1p, b1p, w2p, b2p)

    out = out.reshape(np_pad * P, Dout)[:N]
    return out.reshape(*orig_shape[:-1], Dout)


def xavier_uniform(key, shape, gain):
    # shape is the PyTorch nn.Linear weight shape: (fan_out, fan_in)
    fan_out, fan_in = shape
    bound = gain * math.sqrt(6.0 / (fan_in + fan_out))
    return jax.random.uniform(key, shape, dtype=jnp.float32, minval=-bound, maxval=bound)


if __name__ == "__main__":
    # Module config: input_dim=32, mlp_ratio=4.0 -> hidden_dim=128, output_dim=16
    input_dim, output_dim = 32, 16
    hidden_dim = int(input_dim * 4.0)

    key = jax.random.PRNGKey(0)
    kx, kw1, kw2, kx2 = jax.random.split(key, 4)

    gain = math.sqrt(2.0)
    # PyTorch weights are [out, in]; transpose to [in, out] for the kernel.
    w1_pt = xavier_uniform(kw1, (hidden_dim, input_dim), gain)
    w2_pt = xavier_uniform(kw2, (output_dim, hidden_dim), gain)
    b1 = jnp.zeros((hidden_dim,), dtype=jnp.float32)
    b2 = jnp.zeros((output_dim,), dtype=jnp.float32)
    w1 = w1_pt.T  # [Din, H]
    w2 = w2_pt.T  # [H, Dout]

    def ref_mlp(xx):
        flat = xx.reshape(-1, input_dim)
        h = jnp.maximum(jnp.dot(flat, w1, precision=jax.lax.Precision.HIGHEST) + b1, 0.0)
        r = jnp.dot(h, w2, precision=jax.lax.Precision.HIGHEST) + b2
        return r.reshape(*xx.shape[:-1], output_dim)

    # Case 1: small 3-D input (batch=2, seq=8, features=32), defaults (bf16, pack=8).
    x = jax.random.normal(kx, (2, 8, input_dim), dtype=jnp.float32)
    out = jax.block_until_ready(mlp_pallas(x, w1, b1, w2, b2))
    assert out.shape == (2, 8, output_dim)
    assert jnp.allclose(out, ref_mlp(x), atol=1.5e-1, rtol=1.5e-1)

    # Case 2: row count not a multiple of pack*tile -> padded packed rows, grid of 2 steps.
    x_big = jax.random.normal(kx2, (150, input_dim), dtype=jnp.float32)
    out_big = jax.block_until_ready(mlp_pallas(x_big, w1, b1, w2, b2, tm=64))
    assert out_big.shape == (150, output_dim)
    assert jnp.allclose(out_big, ref_mlp(x_big), atol=1.5e-1, rtol=1.5e-1)

    # Case 3: exact f32 path (v5e-style pack=4), tight tolerance.
    out_f32 = jax.block_until_ready(
        mlp_pallas(x_big, w1, b1, w2, b2, tm=128, pack=4, matmul_dtype=jnp.float32))
    assert out_f32.shape == (150, output_dim)
    assert jnp.allclose(out_f32, ref_mlp(x_big), atol=1e-4, rtol=1e-4)

    # Case 4: packing disabled (pack=1) still lowers and matches.
    out_p1 = jax.block_until_ready(
        mlp_pallas(x_big, w1, b1, w2, b2, pack=1, matmul_dtype=jnp.float32))
    assert out_p1.shape == (150, output_dim)
    assert jnp.allclose(out_p1, ref_mlp(x_big), atol=1e-4, rtol=1e-4)

    print("KERNEL_OK")
</pallas_src>

<mosaic_0001>
module attributes {stable_mosaic.version = 11 : i64} {
  func.func @mlp_kernel(%arg0: i32, %arg1: memref<16x256xbf16, #tpu.memory_space<vmem>>, %arg2: memref<256x1024xbf16, #tpu.memory_space<vmem>>, %arg3: memref<1x1024xf32, #tpu.memory_space<vmem>>, %arg4: memref<1024x128xbf16, #tpu.memory_space<vmem>>, %arg5: memref<1x128xf32, #tpu.memory_space<vmem>>, %arg6: memref<16x128xf32, #tpu.memory_space<vmem>>) attributes {dimension_semantics = [#tpu.dimension_semantics<parallel>], iteration_bounds = array<i64: 1>, scalar_prefetch = 0 : i64, scratch_operands = 0 : i64, tpu.core_type = #tpu.core_type<tc>, window_params = [{transform_indices = @transform_0, window_bounds = array<i64: 16, 256>}, {pipeline_mode = #tpu.pipeline_mode<synchronous>, transform_indices = @transform_1, window_bounds = array<i64: 256, 1024>}, {pipeline_mode = #tpu.pipeline_mode<synchronous>, transform_indices = @transform_2, window_bounds = array<i64: 1, 1024>}, {pipeline_mode = #tpu.pipeline_mode<synchronous>, transform_indices = @transform_3, window_bounds = array<i64: 1024, 128>}, {pipeline_mode = #tpu.pipeline_mode<synchronous>, transform_indices = @transform_4, window_bounds = array<i64: 1, 128>}, {transform_indices = @transform_5, window_bounds = array<i64: 16, 128>}]} {
    %c0 = arith.constant 0 : index
    %c0_0 = arith.constant 0 : index
    %0 = vector.load %arg1[%c0, %c0_0] : memref<16x256xbf16, #tpu.memory_space<vmem>>, vector<16x256xbf16>
    %c0_1 = arith.constant 0 : index
    %c0_2 = arith.constant 0 : index
    %1 = vector.load %arg2[%c0_1, %c0_2] : memref<256x1024xbf16, #tpu.memory_space<vmem>>, vector<256x1024xbf16>
    %cst = arith.constant dense<0.000000e+00> : vector<16x1024xf32>
    %2 = tpu.matmul %0, %1, %cst {dimension_numbers = #tpu.dot_dimension_numbers<[1], [0], [0], [1], [0, 0, 1, 1], [], []>} : vector<16x256xbf16>, vector<256x1024xbf16>, vector<16x1024xf32> -> vector<16x1024xf32>
    %c0_3 = arith.constant 0 : index
    %c0_4 = arith.constant 0 : index
    %3 = vector.load %arg3[%c0_3, %c0_4] : memref<1x1024xf32, #tpu.memory_space<vmem>>, vector<1x1024xf32>
    %4 = vector.broadcast %3 : vector<1x1024xf32> to vector<16x1024xf32>
    %5 = arith.addf %2, %4 : vector<16x1024xf32>
    %cst_5 = arith.constant 0.000000e+00 : f32
    %6 = vector.broadcast %cst_5 : f32 to vector<16x1024xf32>
    %7 = arith.maximumf %5, %6 : vector<16x1024xf32>
    %8 = arith.truncf %7 : vector<16x1024xf32> to vector<16x1024xbf16>
    %c0_6 = arith.constant 0 : index
    %c0_7 = arith.constant 0 : index
    %9 = vector.load %arg4[%c0_6, %c0_7] : memref<1024x128xbf16, #tpu.memory_space<vmem>>, vector<1024x128xbf16>
    %cst_8 = arith.constant dense<0.000000e+00> : vector<16x128xf32>
    %10 = tpu.matmul %8, %9, %cst_8 {dimension_numbers = #tpu.dot_dimension_numbers<[1], [0], [0], [1], [0, 0, 1, 1], [], []>} : vector<16x1024xbf16>, vector<1024x128xbf16>, vector<16x128xf32> -> vector<16x128xf32>
    %c0_9 = arith.constant 0 : index
    %c0_10 = arith.constant 0 : index
    %11 = vector.load %arg5[%c0_9, %c0_10] : memref<1x128xf32, #tpu.memory_space<vmem>>, vector<1x128xf32>
    %12 = vector.broadcast %11 : vector<1x128xf32> to vector<16x128xf32>
    %13 = arith.addf %10, %12 : vector<16x128xf32>
    %c0_11 = arith.constant 0 : index
    %c0_12 = arith.constant 0 : index
    %14 = vector.load %arg6[%c0_11, %c0_12] : memref<16x128xf32, #tpu.memory_space<vmem>>, vector<16x128xf32>
    tpu.vector_store %arg6[%c0_11, %c0_12], %13 {strides = array<i32>} : memref<16x128xf32, #tpu.memory_space<vmem>>, vector<16x128xf32>,
    return
  }
  func.func @transform_0(%arg0: i32) -> (i32, i32) {
    %c0_i32 = arith.constant 0 : i32
    %c0_i32_0 = arith.constant 0 : i32
    return %arg0, %c0_i32 : i32, i32
  }
  func.func @transform_1(%arg0: i32) -> (i32, i32) {
    %c0_i32 = arith.constant 0 : i32
    %c0_i32_0 = arith.constant 0 : i32
    %c0_i32_1 = arith.constant 0 : i32
    return %c0_i32, %c0_i32_0 : i32, i32
  }
  func.func @transform_2(%arg0: i32) -> (i32, i32) {
    %c0_i32 = arith.constant 0 : i32
    %c0_i32_0 = arith.constant 0 : i32
    %c0_i32_1 = arith.constant 0 : i32
    return %c0_i32, %c0_i32_0 : i32, i32
  }
  func.func @transform_3(%arg0: i32) -> (i32, i32) {
    %c0_i32 = arith.constant 0 : i32
    %c0_i32_0 = arith.constant 0 : i32
    %c0_i32_1 = arith.constant 0 : i32
    return %c0_i32, %c0_i32_0 : i32, i32
  }
  func.func @transform_4(%arg0: i32) -> (i32, i32) {
    %c0_i32 = arith.constant 0 : i32
    %c0_i32_0 = arith.constant 0 : i32
    %c0_i32_1 = arith.constant 0 : i32
    return %c0_i32, %c0_i32_0 : i32, i32
  }
  func.func @transform_5(%arg0: i32) -> (i32, i32) {
    %c0_i32 = arith.constant 0 : i32
    %c0_i32_0 = arith.constant 0 : i32
    return %arg0, %c0_i32 : i32, i32
  }
}

</mosaic_0001>

<llo_original>
// kernel: tpu_custom_call.1
$region0: #{tpu_custom_call.1}
  #allocation0 [shape = 'u32[]', space=smem, size = 0x4, offset = 0x4, fixed_abs, tag = 'smem constant byte address 0x4 - core index']
  #allocation1 [shape = 'u32[72,128]{1,0:T(1,128)}', space=vmem, size = 0x9000, scoped, tag = 'internal scratch']
  %s0 = inlined_call_operand.hbm [shape: bf16[16,256], index: 0, kind: input, shape index: {}]
  %s1 = inlined_call_operand.hbm [shape: bf16[256,1024], index: 1, kind: input, shape index: {}]
  %s2 = inlined_call_operand.hbm [shape: f32[1,1024], index: 2, kind: input, shape index: {}]
  %s3 = inlined_call_operand.hbm [shape: bf16[1024,128], index: 3, kind: input, shape index: {}]
  %s4 = inlined_call_operand.vmem [shape: f32[1,128], index: 4, kind: input, shape index: {}]
  %s5 = inlined_call_operand.hbm [shape: f32[16,128], index: 5, kind: output, shape index: {}]
  %s6 = sld [smem:[#allocation0]]
  $region46: #{tpu_custom_call.1} parent=0
    _
  %s8 = ssub.s32 1, %s6
  %s9 = scalar_select 0, %s8, %s6
  $region1: #{tpu_custom_call.1} parent=0
    #allocation2 [shape = 'u8[8192]{0}', space=vmem, size = 0x2000, scoped, tag = 'input window, operand 0, single buffered']
    #allocation3 [shape = 's32[1]{0}', space=sflag, size = 0x4, scoped, tag = 'scoped memory for tpu_custom_call.1']
    #allocation4 [shape = 's32[1]{0}', space=sflag, size = 0x4, scoped, tag = 'scoped memory for tpu_custom_call.1']
    #allocation5 [shape = 'u8[524288]{0}', space=vmem, size = 0x80000, scoped, tag = 'input window, operand 1, single buffered']
    #allocation6 [shape = 's32[1]{0}', space=sflag, size = 0x4, scoped, tag = 'scoped memory for tpu_custom_call.1']
    #allocation7 [shape = 'u8[4096]{0}', space=vmem, size = 0x1000, scoped, tag = 'input window, operand 2, single buffered']
    #allocation8 [shape = 'u8[262144]{0}', space=vmem, size = 0x40000, scoped, tag = 'input window, operand 3, single buffered']
    #allocation9 [shape = 's32[1]{0}', space=sflag, size = 0x4, scoped, tag = 'scoped memory for tpu_custom_call.1']
    #allocation10 [shape = 'u8[8192]{0}', space=vmem, size = 0x2000, scoped, tag = 'output window, operand 0, single buffered']
    %10 = vsyncpa [#allocation3], 0
    %11 = vsyncpa [#allocation6], 0
    %12 = vsyncpa [#allocation9], 0
    %13 = vsyncpa [#allocation4], 0
    // Predicated region
    $region2: #{tpu_custom_call.1} parent=1 // pred_check
      _
    $region3: #{tpu_custom_call.1} parent=1 // pred_check_branch
      %15 = sbr.rel (0) target = $region5
    $region4: #{tpu_custom_call.1} parent=1 // pred_region
      %17 = vsyncadd [#allocation3], 0
      %s18 = sshll.u32 %s0, 4
      %s19 = int_to_ptr.hbm [resolvable:$true] %s18
      %s20 = sshll.u32 [#allocation2], 4
      %s21 = int_to_ptr.vmem [resolvable:$true] %s20
      %26 = dma.hbm_to_vmem [thread:$0]  %s19, 256, %s21, [#allocation3], 128, 128, 8
    $region5: #{tpu_custom_call.1} parent=1 // pred_fallthru
      _
    // Predicated region
    $region6: #{tpu_custom_call.1} parent=1 // pred_check
      _
    $region7: #{tpu_custom_call.1} parent=1 // pred_check_branch
      %28 = sbr.rel (0) target = $region9
    $region8: #{tpu_custom_call.1} parent=1 // pred_region
      %30 = vsyncadd [#allocation6], 0
      %s31 = sshll.u32 %s1, 4
      %s32 = int_to_ptr.hbm [resolvable:$true] %s31
      %s33 = sshll.u32 [#allocation5], 4
      %s34 = int_to_ptr.vmem [resolvable:$true] %s33
      %39 = dma.hbm_to_vmem [thread:$0]  %s32, 16384, %s34, [#allocation6], 512, 512, 32
    $region9: #{tpu_custom_call.1} parent=1 // pred_fallthru
      _
    // Predicated region
    $region10: #{tpu_custom_call.1} parent=1 // pred_check
      _
    $region11: #{tpu_custom_call.1} parent=1 // pred_check_branch
      %41 = sbr.rel (0) target = $region13
    $region12: #{tpu_custom_call.1} parent=1 // pred_region
      %43 = vsyncadd [#allocation6], 0
      %s45 = sshll.u32 %s2, 4
      %s46 = int_to_ptr.hbm [resolvable:$true] %s45
      %s47 = sshll.u32 [#allocation7], 4
      %s48 = int_to_ptr.vmem [resolvable:$true] %s47
      %50 = dma.hbm_to_vmem [thread:$0]  %s46, 128, %s48, [#allocation6]
    $region13: #{tpu_custom_call.1} parent=1 // pred_fallthru
      _
    // Predicated region
    $region14: #{tpu_custom_call.1} parent=1 // pred_check
      _
    $region15: #{tpu_custom_call.1} parent=1 // pred_check_branch
      %52 = sbr.rel (0) target = $region17
    $region16: #{tpu_custom_call.1} parent=1 // pred_region
      %54 = vsyncadd [#allocation9], 0
      %s55 = sshll.u32 %s3, 4
      %s56 = int_to_ptr.hbm [resolvable:$true] %s55
      %s57 = sshll.u32 [#allocation8], 4
      %s58 = int_to_ptr.vmem [resolvable:$true] %s57
      %63 = dma.hbm_to_vmem [thread:$0]  %s56, 8192, %s58, [#allocation9], 64, 64, 4
    $region17: #{tpu_custom_call.1} parent=1 // pred_fallthru
      _
    // Predicated region
    $region18: #{tpu_custom_call.1} parent=1 // pred_check
      _
    $region19: #{tpu_custom_call.1} parent=1 // pred_check_branch
      %65 = sbr.rel (0) target = $region21
    $region20: #{tpu_custom_call.1} parent=1 // pred_region
      _
    $region21: #{tpu_custom_call.1} parent=1 // pred_fallthru
      _
    // Predicated region
    $region22: #{tpu_custom_call.1} parent=1 // pred_check
      _
    $region23: #{tpu_custom_call.1} parent=1 // pred_check_branch
      %67 = sbr.rel (0) target = $region25
    $region24: #{tpu_custom_call.1} parent=1 // pred_region
      %69 = dma.done [#allocation3], 256
    $region25: #{tpu_custom_call.1} parent=1 // pred_fallthru
      _
    // Predicated region
    $region26: #{tpu_custom_call.1} parent=1 // pred_check
      _
    $region27: #{tpu_custom_call.1} parent=1 // pred_check_branch
      %71 = sbr.rel (0) target = $region29
    $region28: #{tpu_custom_call.1} parent=1 // pred_region
      %73 = dma.done [#allocation6], 16384
    $region29: #{tpu_custom_call.1} parent=1 // pred_fallthru
      _
    // Predicated region
    $region30: #{tpu_custom_call.1} parent=1 // pred_check
      _
    $region31: #{tpu_custom_call.1} parent=1 // pred_check_branch
      %75 = sbr.rel (0) target = $region33
    $region32: #{tpu_custom_call.1} parent=1 // pred_region
      %77 = dma.done [#allocation6], 128
    $region33: #{tpu_custom_call.1} parent=1 // pred_fallthru
      _
    // Predicated region
    $region34: #{tpu_custom_call.1} parent=1 // pred_check
      _
    $region35: #{tpu_custom_call.1} parent=1 // pred_check_branch
      %79 = sbr.rel (0) target = $region37
    $region36: #{tpu_custom_call.1} parent=1 // pred_region
      %81 = dma.done [#allocation9], 8192
    $region37: #{tpu_custom_call.1} parent=1 // pred_fallthru
      _
    %v82 = vld [vmem:[#allocation2] sm:$0xff]
    %v83 = vld [vmem:[#allocation2 + $0x8] sm:$0xff]
    %v84 = vld [vmem:[#allocation5] sm:$0xff]
    %v85 = vld [vmem:[#allocation5 + $0x8] sm:$0xff]
    %v86 = vld [vmem:[#allocation5 + $0x10] sm:$0xff]
    %v87 = vld [vmem:[#allocation5 + $0x18] sm:$0xff]
    %v88 = vld [vmem:[#allocation5 + $0x20] sm:$0xff]
    %v89 = vld [vmem:[#allocation5 + $0x28] sm:$0xff]
    %v90 = vld [vmem:[#allocation5 + $0x30] sm:$0xff]
    %v91 = vld [vmem:[#allocation5 + $0x38] sm:$0xff]
    %v92 = vld [vmem:[#allocation5 + $0x40] sm:$0xff]
    %v93 = vld [vmem:[#allocation5 + $0x48] sm:$0xff]
    %v94 = vld [vmem:[#allocation5 + $0x50] sm:$0xff]
    %v95 = vld [vmem:[#allocation5 + $0x58] sm:$0xff]
    %v96 = vld [vmem:[#allocation5 + $0x60] sm:$0xff]
    %v97 = vld [vmem:[#allocation5 + $0x68] sm:$0xff]
    %v98 = vld [vmem:[#allocation5 + $0x70] sm:$0xff]
    %v99 = vld [vmem:[#allocation5 + $0x78] sm:$0xff]
    %v100 = vld [vmem:[#allocation5 + $0x80] sm:$0xff]
    %v101 = vld [vmem:[#allocation5 + $0x88] sm:$0xff]
    %v102 = vld [vmem:[#allocation5 + $0x90] sm:$0xff]
    %v103 = vld [vmem:[#allocation5 + $0x98] sm:$0xff]
    %v104 = vld [vmem:[#allocation5 + $0xa0] sm:$0xff]
    %v105 = vld [vmem:[#allocation5 + $0xa8] sm:$0xff]
    %v106 = vld [vmem:[#allocation5 + $0xb0] sm:$0xff]
    %v107 = vld [vmem:[#allocation5 + $0xb8] sm:$0xff]
    %v108 = vld [vmem:[#allocation5 + $0xc0] sm:$0xff]
    %v109 = vld [vmem:[#allocation5 + $0xc8] sm:$0xff]
    %v110 = vld [vmem:[#allocation5 + $0xd0] sm:$0xff]
    %v111 = vld [vmem:[#allocation5 + $0xd8] sm:$0xff]
    %v112 = vld [vmem:[#allocation5 + $0xe0] sm:$0xff]
    %v113 = vld [vmem:[#allocation5 + $0xe8] sm:$0xff]
    %v114 = vld [vmem:[#allocation5 + $0xf0] sm:$0xff]
    %v115 = vld [vmem:[#allocation5 + $0xf8] sm:$0xff]
    %v116 = vld [vmem:[#allocation5 + $0x100] sm:$0xff]
    %v117 = vld [vmem:[#allocation5 + $0x108] sm:$0xff]
    %v118 = vld [vmem:[#allocation5 + $0x110] sm:$0xff]
    %v119 = vld [vmem:[#allocation5 + $0x118] sm:$0xff]
    %v120 = vld [vmem:[#allocation5 + $0x120] sm:$0xff]
    %v121 = vld [vmem:[#allocation5 + $0x128] sm:$0xff]
    %v122 = vld [vmem:[#allocation5 + $0x130] sm:$0xff]
    %v123 = vld [vmem:[#allocation5 + $0x138] sm:$0xff]
    %v124 = vld [vmem:[#allocation5 + $0x140] sm:$0xff]
    %v125 = vld [vmem:[#allocation5 + $0x148] sm:$0xff]
    %v126 = vld [vmem:[#allocation5 + $0x150] sm:$0xff]
    %v127 = vld [vmem:[#allocation5 + $0x158] sm:$0xff]
    %v128 = vld [vmem:[#allocation5 + $0x160] sm:$0xff]
    %v129 = vld [vmem:[#allocation5 + $0x168] sm:$0xff]
    %v130 = vld [vmem:[#allocation5 + $0x170] sm:$0xff]
    %v131 = vld [vmem:[#allocation5 + $0x178] sm:$0xff]
    %v132 = vld [vmem:[#allocation5 + $0x180] sm:$0xff]
    %v133 = vld [vmem:[#allocation5 + $0x188] sm:$0xff]
    %v134 = vld [vmem:[#allocation5 + $0x190] sm:$0xff]
    %v135 = vld [vmem:[#allocation5 + $0x198] sm:$0xff]
    %v136 = vld [vmem:[#allocation5 + $0x1a0] sm:$0xff]
    %v137 = vld [vmem:[#allocation5 + $0x1a8] sm:$0xff]
    %v138 = vld [vmem:[#allocation5 + $0x1b0] sm:$0xff]
    %v139 = vld [vmem:[#allocation5 + $0x1b8] sm:$0xff]
    %v140 = vld [vmem:[#allocation5 + $0x1c0] sm:$0xff]
    %v141 = vld [vmem:[#allocation5 + $0x1c8] sm:$0xff]
    %v142 = vld [vmem:[#allocation5 + $0x1d0] sm:$0xff]
    %v143 = vld [vmem:[#allocation5 + $0x1d8] sm:$0xff]
    %v144 = vld [vmem:[#allocation5 + $0x1e0] sm:$0xff]
    %v145 = vld [vmem:[#allocation5 + $0x1e8] sm:$0xff]
    %v146 = vld [vmem:[#allocation5 + $0x1f0] sm:$0xff]
    %v147 = vld [vmem:[#allocation5 + $0x1f8] sm:$0xff]
    %v148 = vld [vmem:[#allocation5 + $0x200] sm:$0xff]
    %v149 = vld [vmem:[#allocation5 + $0x208] sm:$0xff]
    %v150 = vld [vmem:[#allocation5 + $0x210] sm:$0xff]
    %v151 = vld [vmem:[#allocation5 + $0x218] sm:$0xff]
    %v152 = vld [vmem:[#allocation5 + $0x220] sm:$0xff]
    %v153 = vld [vmem:[#allocation5 + $0x228] sm:$0xff]
    %v154 = vld [vmem:[#allocation5 + $0x230] sm:$0xff]
    %v155 = vld [vmem:[#allocation5 + $0x238] sm:$0xff]
    %v156 = vld [vmem:[#allocation5 + $0x240] sm:$0xff]
    %v157 = vld [vmem:[#allocation5 + $0x248] sm:$0xff]
    %v158 = vld [vmem:[#allocation5 + $0x250] sm:$0xff]
    %v159 = vld [vmem:[#allocation5 + $0x258] sm:$0xff]
    %v160 = vld [vmem:[#allocation5 + $0x260] sm:$0xff]
    %v161 = vld [vmem:[#allocation5 + $0x268] sm:$0xff]
    %v162 = vld [vmem:[#allocation5 + $0x270] sm:$0xff]
    %v163 = vld [vmem:[#allocation5 + $0x278] sm:$0xff]
    %v164 = vld [vmem:[#allocation5 + $0x280] sm:$0xff]
    %v165 = vld [vmem:[#allocation5 + $0x288] sm:$0xff]
    %v166 = vld [vmem:[#allocation5 + $0x290] sm:$0xff]
    %v167 = vld [vmem:[#allocation5 + $0x298] sm:$0xff]
    %v168 = vld [vmem:[#allocation5 + $0x2a0] sm:$0xff]
    %v169 = vld [vmem:[#allocation5 + $0x2a8] sm:$0xff]
    %v170 = vld [vmem:[#allocation5 + $0x2b0] sm:$0xff]
    %v171 = vld [vmem:[#allocation5 + $0x2b8] sm:$0xff]
    %v172 = vld [vmem:[#allocation5 + $0x2c0] sm:$0xff]
    %v173 = vld [vmem:[#allocation5 + $0x2c8] sm:$0xff]
    %v174 = vld [vmem:[#allocation5 + $0x2d0] sm:$0xff]
    %v175 = vld [vmem:[#allocation5 + $0x2d8] sm:$0xff]
    %v176 = vld [vmem:[#allocation5 + $0x2e0] sm:$0xff]
    %v177 = vld [vmem:[#allocation5 + $0x2e8] sm:$0xff]
    %v178 = vld [vmem:[#allocation5 + $0x2f0] sm:$0xff]
    %v179 = vld [vmem:[#allocation5 + $0x2f8] sm:$0xff]
    %v180 = vld [vmem:[#allocation5 + $0x300] sm:$0xff]
    %v181 = vld [vmem:[#allocation5 + $0x308] sm:$0xff]
    %v182 = vld [vmem:[#allocation5 + $0x310] sm:$0xff]
    %v183 = vld [vmem:[#allocation5 + $0x318] sm:$0xff]
    %v184 = vld [vmem:[#allocation5 + $0x320] sm:$0xff]
    %v185 = vld [vmem:[#allocation5 + $0x328] sm:$0xff]
    %v186 = vld [vmem:[#allocation5 + $0x330] sm:$0xff]
    %v187 = vld [vmem:[#allocation5 + $0x338] sm:$0xff]
    %v188 = vld [vmem:[#allocation5 + $0x340] sm:$0xff]
    %v189 = vld [vmem:[#allocation5 + $0x348] sm:$0xff]
    %v190 = vld [vmem:[#allocation5 + $0x350] sm:$0xff]
    %v191 = vld [vmem:[#allocation5 + $0x358] sm:$0xff]
    %v192 = vld [vmem:[#allocation5 + $0x360] sm:$0xff]
    %v193 = vld [vmem:[#allocation5 + $0x368] sm:$0xff]
    %v194 = vld [vmem:[#allocation5 + $0x370] sm:$0xff]
    %v195 = vld [vmem:[#allocation5 + $0x378] sm:$0xff]
    %v196 = vld [vmem:[#allocation5 + $0x380] sm:$0xff]
    %v197 = vld [vmem:[#allocation5 + $0x388] sm:$0xff]
    %v198 = vld [vmem:[#allocation5 + $0x390] sm:$0xff]
    %v199 = vld [vmem:[#allocation5 + $0x398] sm:$0xff]
    %v200 = vld [vmem:[#allocation5 + $0x3a0] sm:$0xff]
    %v201 = vld [vmem:[#allocation5 + $0x3a8] sm:$0xff]
    %v202 = vld [vmem:[#allocation5 + $0x3b0] sm:$0xff]
    %v203 = vld [vmem:[#allocation5 + $0x3b8] sm:$0xff]
    %v204 = vld [vmem:[#allocation5 + $0x3c0] sm:$0xff]
    %v205 = vld [vmem:[#allocation5 + $0x3c8] sm:$0xff]
    %v206 = vld [vmem:[#allocation5 + $0x3d0] sm:$0xff]
    %v207 = vld [vmem:[#allocation5 + $0x3d8] sm:$0xff]
    %v208 = vld [vmem:[#allocation5 + $0x3e0] sm:$0xff]
    %v209 = vld [vmem:[#allocation5 + $0x3e8] sm:$0xff]
    %v210 = vld [vmem:[#allocation5 + $0x3f0] sm:$0xff]
    %v211 = vld [vmem:[#allocation5 + $0x3f8] sm:$0xff]
    %v212 = vld [vmem:[#allocation7] sm:$0xff]
    %v214 = vperm.slane %v212, 0
    %v215 = vperm.slane %v212, 1
    %v216 = vperm.slane %v212, 2
    %v217 = vperm.slane %v212, 3
    %v218 = vperm.slane %v212, 4
    %v219 = vperm.slane %v212, 5
    %v220 = vperm.slane %v212, 6
    %v221 = vperm.slane %v212, 7
    %v232 = vunpack.c.l.b16 %v82
    %v233 = vunpack.c.h.b16 %v82
    %v234 = vunpack.c.l.b16 %v83
    %v235 = vunpack.c.h.b16 %v83
    %v236 = vpack.c.b16 %v234, %v232
    %v237 = vpack.c.b16 %v235, %v233
    %v368 = vunpack.c.l.b16 %v84
    %v369 = vunpack.c.h.b16 %v84
    %v370 = vunpack.c.l.b16 %v85
    %v371 = vunpack.c.h.b16 %v85
    %v372 = vunpack.c.l.b16 %v86
    %v373 = vunpack.c.h.b16 %v86
    %v374 = vunpack.c.l.b16 %v87
    %v375 = vunpack.c.h.b16 %v87
    %v376 = vunpack.c.l.b16 %v88
    %v377 = vunpack.c.h.b16 %v88
    %v378 = vunpack.c.l.b16 %v89
    %v379 = vunpack.c.h.b16 %v89
    %v380 = vunpack.c.l.b16 %v90
    %v381 = vunpack.c.h.b16 %v90
    %v382 = vunpack.c.l.b16 %v91
    %v383 = vunpack.c.h.b16 %v91
    %v384 = vunpack.c.l.b16 %v92
    %v385 = vunpack.c.h.b16 %v92
    %v386 = vunpack.c.l.b16 %v93
    %v387 = vunpack.c.h.b16 %v93
    %v388 = vunpack.c.l.b16 %v94
    %v389 = vunpack.c.h.b16 %v94
    %v390 = vunpack.c.l.b16 %v95
    %v391 = vunpack.c.h.b16 %v95
    %v392 = vunpack.c.l.b16 %v96
    %v393 = vunpack.c.h.b16 %v96
    %v394 = vunpack.c.l.b16 %v97
    %v395 = vunpack.c.h.b16 %v97
    %v396 = vunpack.c.l.b16 %v98
    %v397 = vunpack.c.h.b16 %v98
    %v398 = vunpack.c.l.b16 %v99
    %v399 = vunpack.c.h.b16 %v99
    %v400 = vunpack.c.l.b16 %v100
    %v401 = vunpack.c.h.b16 %v100
    %v402 = vunpack.c.l.b16 %v101
    %v403 = vunpack.c.h.b16 %v101
    %v404 = vunpack.c.l.b16 %v102
    %v405 = vunpack.c.h.b16 %v102
    %v406 = vunpack.c.l.b16 %v103
    %v407 = vunpack.c.h.b16 %v103
    %v408 = vunpack.c.l.b16 %v104
    %v409 = vunpack.c.h.b16 %v104
    %v410 = vunpack.c.l.b16 %v105
    %v411 = vunpack.c.h.b16 %v105
    %v412 = vunpack.c.l.b16 %v106
    %v413 = vunpack.c.h.b16 %v106
    %v414 = vunpack.c.l.b16 %v107
    %v415 = vunpack.c.h.b16 %v107
    %v416 = vunpack.c.l.b16 %v108
    %v417 = vunpack.c.h.b16 %v108
    %v418 = vunpack.c.l.b16 %v109
    %v419 = vunpack.c.h.b16 %v109
    %v420 = vunpack.c.l.b16 %v110
    %v421 = vunpack.c.h.b16 %v110
    %v422 = vunpack.c.l.b16 %v111
    %v423 = vunpack.c.h.b16 %v111
    %v424 = vunpack.c.l.b16 %v112
    %v425 = vunpack.c.h.b16 %v112
    %v426 = vunpack.c.l.b16 %v113
    %v427 = vunpack.c.h.b16 %v113
    %v428 = vunpack.c.l.b16 %v114
    %v429 = vunpack.c.h.b16 %v114
    %v430 = vunpack.c.l.b16 %v115
    %v431 = vunpack.c.h.b16 %v115
    %v432 = vunpack.c.l.b16 %v116
    %v433 = vunpack.c.h.b16 %v116
    %v434 = vunpack.c.l.b16 %v117
    %v435 = vunpack.c.h.b16 %v117
    %v436 = vunpack.c.l.b16 %v118
    %v437 = vunpack.c.h.b16 %v118
    %v438 = vunpack.c.l.b16 %v119
    %v439 = vunpack.c.h.b16 %v119
    %v440 = vunpack.c.l.b16 %v120
    %v441 = vunpack.c.h.b16 %v120
    %v442 = vunpack.c.l.b16 %v121
    %v443 = vunpack.c.h.b16 %v121
    %v444 = vunpack.c.l.b16 %v122
    %v445 = vunpack.c.h.b16 %v122
    %v446 = vunpack.c.l.b16 %v123
    %v447 = vunpack.c.h.b16 %v123
    %v448 = vunpack.c.l.b16 %v124
    %v449 = vunpack.c.h.b16 %v124
    %v450 = vunpack.c.l.b16 %v125
    %v451 = vunpack.c.h.b16 %v125
    %v452 = vunpack.c.l.b16 %v126
    %v453 = vunpack.c.h.b16 %v126
    %v454 = vunpack.c.l.b16 %v127
    %v455 = vunpack.c.h.b16 %v127
    %v456 = vunpack.c.l.b16 %v128
    %v457 = vunpack.c.h.b16 %v128
    %v458 = vunpack.c.l.b16 %v129
    %v459 = vunpack.c.h.b16 %v129
    %v460 = vunpack.c.l.b16 %v130
    %v461 = vunpack.c.h.b16 %v130
    %v462 = vunpack.c.l.b16 %v131
    %v463 = vunpack.c.h.b16 %v131
    %v464 = vunpack.c.l.b16 %v132
    %v465 = vunpack.c.h.b16 %v132
    %v466 = vunpack.c.l.b16 %v133
    %v467 = vunpack.c.h.b16 %v133
    %v468 = vunpack.c.l.b16 %v134
    %v469 = vunpack.c.h.b16 %v134
    %v470 = vunpack.c.l.b16 %v135
    %v471 = vunpack.c.h.b16 %v135
    %v472 = vunpack.c.l.b16 %v136
    %v473 = vunpack.c.h.b16 %v136
    %v474 = vunpack.c.l.b16 %v137
    %v475 = vunpack.c.h.b16 %v137
    %v476 = vunpack.c.l.b16 %v138
    %v477 = vunpack.c.h.b16 %v138
    %v478 = vunpack.c.l.b16 %v139
    %v479 = vunpack.c.h.b16 %v139
    %v480 = vunpack.c.l.b16 %v140
    %v481 = vunpack.c.h.b16 %v140
    %v482 = vunpack.c.l.b16 %v141
    %v483 = vunpack.c.h.b16 %v141
    %v484 = vunpack.c.l.b16 %v142
    %v485 = vunpack.c.h.b16 %v142
    %v486 = vunpack.c.l.b16 %v143
    %v487 = vunpack.c.h.b16 %v143
    %v488 = vunpack.c.l.b16 %v144
    %v489 = vunpack.c.h.b16 %v144
    %v490 = vunpack.c.l.b16 %v145
    %v491 = vunpack.c.h.b16 %v145
    %v492 = vunpack.c.l.b16 %v146
    %v493 = vunpack.c.h.b16 %v146
    %v494 = vunpack.c.l.b16 %v147
    %v495 = vunpack.c.h.b16 %v147
    %v496 = vunpack.c.l.b16 %v148
    %v497 = vunpack.c.h.b16 %v148
    %v498 = vunpack.c.l.b16 %v149
    %v499 = vunpack.c.h.b16 %v149
    %v500 = vunpack.c.l.b16 %v150
    %v501 = vunpack.c.h.b16 %v150
    %v502 = vunpack.c.l.b16 %v151
    %v503 = vunpack.c.h.b16 %v151
    %v504 = vunpack.c.l.b16 %v152
    %v505 = vunpack.c.h.b16 %v152
    %v506 = vunpack.c.l.b16 %v153
    %v507 = vunpack.c.h.b16 %v153
    %v508 = vunpack.c.l.b16 %v154
    %v509 = vunpack.c.h.b16 %v154
    %v510 = vunpack.c.l.b16 %v155
    %v511 = vunpack.c.h.b16 %v155
    %v512 = vunpack.c.l.b16 %v156
    %v513 = vunpack.c.h.b16 %v156
    %v514 = vunpack.c.l.b16 %v157
    %v515 = vunpack.c.h.b16 %v157
    %v516 = vunpack.c.l.b16 %v158
    %v517 = vunpack.c.h.b16 %v158
    %v518 = vunpack.c.l.b16 %v159
    %v519 = vunpack.c.h.b16 %v159
    %v520 = vunpack.c.l.b16 %v160
    %v521 = vunpack.c.h.b16 %v160
    %v522 = vunpack.c.l.b16 %v161
    %v523 = vunpack.c.h.b16 %v161
    %v524 = vunpack.c.l.b16 %v162
    %v525 = vunpack.c.h.b16 %v162
    %v526 = vunpack.c.l.b16 %v163
    %v527 = vunpack.c.h.b16 %v163
    %v528 = vunpack.c.l.b16 %v164
    %v529 = vunpack.c.h.b16 %v164
    %v530 = vunpack.c.l.b16 %v165
    %v531 = vunpack.c.h.b16 %v165
    %v532 = vunpack.c.l.b16 %v166
    %v533 = vunpack.c.h.b16 %v166
    %v534 = vunpack.c.l.b16 %v167
    %v535 = vunpack.c.h.b16 %v167
    %v536 = vunpack.c.l.b16 %v168
    %v537 = vunpack.c.h.b16 %v168
    %v538 = vunpack.c.l.b16 %v169
    %v539 = vunpack.c.h.b16 %v169
    %v540 = vunpack.c.l.b16 %v170
    %v541 = vunpack.c.h.b16 %v170
    %v542 = vunpack.c.l.b16 %v171
    %v543 = vunpack.c.h.b16 %v171
    %v544 = vunpack.c.l.b16 %v172
    %v545 = vunpack.c.h.b16 %v172
    %v546 = vunpack.c.l.b16 %v173
    %v547 = vunpack.c.h.b16 %v173
    %v548 = vunpack.c.l.b16 %v174
    %v549 = vunpack.c.h.b16 %v174
    %v550 = vunpack.c.l.b16 %v175
    %v551 = vunpack.c.h.b16 %v175
    %v552 = vunpack.c.l.b16 %v176
    %v553 = vunpack.c.h.b16 %v176
    %v554 = vunpack.c.l.b16 %v177
    %v555 = vunpack.c.h.b16 %v177
    %v556 = vunpack.c.l.b16 %v178
    %v557 = vunpack.c.h.b16 %v178
    %v558 = vunpack.c.l.b16 %v179
    %v559 = vunpack.c.h.b16 %v179
    %v560 = vunpack.c.l.b16 %v180
    %v561 = vunpack.c.h.b16 %v180
    %v562 = vunpack.c.l.b16 %v181
    %v563 = vunpack.c.h.b16 %v181
    %v564 = vunpack.c.l.b16 %v182
    %v565 = vunpack.c.h.b16 %v182
    %v566 = vunpack.c.l.b16 %v183
    %v567 = vunpack.c.h.b16 %v183
    %v568 = vunpack.c.l.b16 %v184
    %v569 = vunpack.c.h.b16 %v184
    %v570 = vunpack.c.l.b16 %v185
    %v571 = vunpack.c.h.b16 %v185
    %v572 = vunpack.c.l.b16 %v186
    %v573 = vunpack.c.h.b16 %v186
    %v574 = vunpack.c.l.b16 %v187
    %v575 = vunpack.c.h.b16 %v187
    %v576 = vunpack.c.l.b16 %v188
    %v577 = vunpack.c.h.b16 %v188
    %v578 = vunpack.c.l.b16 %v189
    %v579 = vunpack.c.h.b16 %v189
    %v580 = vunpack.c.l.b16 %v190
    %v581 = vunpack.c.h.b16 %v190
    %v582 = vunpack.c.l.b16 %v191
    %v583 = vunpack.c.h.b16 %v191
    %v584 = vunpack.c.l.b16 %v192
    %v585 = vunpack.c.h.b16 %v192
    %v586 = vunpack.c.l.b16 %v193
    %v587 = vunpack.c.h.b16 %v193
    %v588 = vunpack.c.l.b16 %v194
    %v589 = vunpack.c.h.b16 %v194
    %v590 = vunpack.c.l.b16 %v195
    %v591 = vunpack.c.h.b16 %v195
    %v592 = vunpack.c.l.b16 %v196
    %v593 = vunpack.c.h.b16 %v196
    %v594 = vunpack.c.l.b16 %v197
    %v595 = vunpack.c.h.b16 %v197
    %v596 = vunpack.c.l.b16 %v198
    %v597 = vunpack.c.h.b16 %v198
    %v598 = vunpack.c.l.b16 %v199
    %v599 = vunpack.c.h.b16 %v199
    %v600 = vunpack.c.l.b16 %v200
    %v601 = vunpack.c.h.b16 %v200
    %v602 = vunpack.c.l.b16 %v201
    %v603 = vunpack.c.h.b16 %v201
    %v604 = vunpack.c.l.b16 %v202
    %v605 = vunpack.c.h.b16 %v202
    %v606 = vunpack.c.l.b16 %v203
    %v607 = vunpack.c.h.b16 %v203
    %v608 = vunpack.c.l.b16 %v204
    %v609 = vunpack.c.h.b16 %v204
    %v610 = vunpack.c.l.b16 %v205
    %v611 = vunpack.c.h.b16 %v205
    %v612 = vunpack.c.l.b16 %v206
    %v613 = vunpack.c.h.b16 %v206
    %v614 = vunpack.c.l.b16 %v207
    %v615 = vunpack.c.h.b16 %v207
    %v616 = vunpack.c.l.b16 %v208
    %v617 = vunpack.c.h.b16 %v208
    %v618 = vunpack.c.l.b16 %v209
    %v619 = vunpack.c.h.b16 %v209
    %v620 = vunpack.c.l.b16 %v210
    %v621 = vunpack.c.h.b16 %v210
    %v622 = vunpack.c.l.b16 %v211
    %v623 = vunpack.c.h.b16 %v211
    %v624 = vpack.c.b16 %v376, %v368
    %v625 = vpack.c.b16 %v377, %v369
    %v626 = vpack.c.b16 %v378, %v370
    %v627 = vpack.c.b16 %v379, %v371
    %v628 = vpack.c.b16 %v380, %v372
    %v629 = vpack.c.b16 %v381, %v373
    %v630 = vpack.c.b16 %v382, %v374
    %v631 = vpack.c.b16 %v383, %v375
    %v632 = vpack.c.b16 %v392, %v384
    %v633 = vpack.c.b16 %v393, %v385
    %v634 = vpack.c.b16 %v394, %v386
    %v635 = vpack.c.b16 %v395, %v387
    %v636 = vpack.c.b16 %v396, %v388
    %v637 = vpack.c.b16 %v397, %v389
    %v638 = vpack.c.b16 %v398, %v390
    %v639 = vpack.c.b16 %v399, %v391
    %v640 = vpack.c.b16 %v408, %v400
    %v641 = vpack.c.b16 %v409, %v401
    %v642 = vpack.c.b16 %v410, %v402
    %v643 = vpack.c.b16 %v411, %v403
    %v644 = vpack.c.b16 %v412, %v404
    %v645 = vpack.c.b16 %v413, %v405
    %v646 = vpack.c.b16 %v414, %v406
    %v647 = vpack.c.b16 %v415, %v407
    %v648 = vpack.c.b16 %v424, %v416
    %v649 = vpack.c.b16 %v425, %v417
    %v650 = vpack.c.b16 %v426, %v418
    %v651 = vpack.c.b16 %v427, %v419
    %v652 = vpack.c.b16 %v428, %v420
    %v653 = vpack.c.b16 %v429, %v421
    %v654 = vpack.c.b16 %v430, %v422
    %v655 = vpack.c.b16 %v431, %v423
    %v656 = vpack.c.b16 %v440, %v432
    %v657 = vpack.c.b16 %v441, %v433
    %v658 = vpack.c.b16 %v442, %v434
    %v659 = vpack.c.b16 %v443, %v435
    %v660 = vpack.c.b16 %v444, %v436
    %v661 = vpack.c.b16 %v445, %v437
    %v662 = vpack.c.b16 %v446, %v438
    %v663 = vpack.c.b16 %v447, %v439
    %v664 = vpack.c.b16 %v456, %v448
    %v665 = vpack.c.b16 %v457, %v449
    %v666 = vpack.c.b16 %v458, %v450
    %v667 = vpack.c.b16 %v459, %v451
    %v668 = vpack.c.b16 %v460, %v452
    %v669 = vpack.c.b16 %v461, %v453
    %v670 = vpack.c.b16 %v462, %v454
    %v671 = vpack.c.b16 %v463, %v455
    %v672 = vpack.c.b16 %v472, %v464
    %v673 = vpack.c.b16 %v473, %v465
    %v674 = vpack.c.b16 %v474, %v466
    %v675 = vpack.c.b16 %v475, %v467
    %v676 = vpack.c.b16 %v476, %v468
    %v677 = vpack.c.b16 %v477, %v469
    %v678 = vpack.c.b16 %v478, %v470
    %v679 = vpack.c.b16 %v479, %v471
    %v680 = vpack.c.b16 %v488, %v480
    %v681 = vpack.c.b16 %v489, %v481
    %v682 = vpack.c.b16 %v490, %v482
    %v683 = vpack.c.b16 %v491, %v483
    %v684 = vpack.c.b16 %v492, %v484
    %v685 = vpack.c.b16 %v493, %v485
    %v686 = vpack.c.b16 %v494, %v486
    %v687 = vpack.c.b16 %v495, %v487
    %v688 = vpack.c.b16 %v504, %v496
    %v689 = vpack.c.b16 %v505, %v497
    %v690 = vpack.c.b16 %v506, %v498
    %v691 = vpack.c.b16 %v507, %v499
    %v692 = vpack.c.b16 %v508, %v500
    %v693 = vpack.c.b16 %v509, %v501
    %v694 = vpack.c.b16 %v510, %v502
    %v695 = vpack.c.b16 %v511, %v503
    %v696 = vpack.c.b16 %v520, %v512
    %v697 = vpack.c.b16 %v521, %v513
    %v698 = vpack.c.b16 %v522, %v514
    %v699 = vpack.c.b16 %v523, %v515
    %v700 = vpack.c.b16 %v524, %v516
    %v701 = vpack.c.b16 %v525, %v517
    %v702 = vpack.c.b16 %v526, %v518
    %v703 = vpack.c.b16 %v527, %v519
    %v704 = vpack.c.b16 %v536, %v528
    %v705 = vpack.c.b16 %v537, %v529
    %v706 = vpack.c.b16 %v538, %v530
    %v707 = vpack.c.b16 %v539, %v531
    %v708 = vpack.c.b16 %v540, %v532
    %v709 = vpack.c.b16 %v541, %v533
    %v710 = vpack.c.b16 %v542, %v534
    %v711 = vpack.c.b16 %v543, %v535
    %v712 = vpack.c.b16 %v552, %v544
    %v713 = vpack.c.b16 %v553, %v545
    %v714 = vpack.c.b16 %v554, %v546
    %v715 = vpack.c.b16 %v555, %v547
    %v716 = vpack.c.b16 %v556, %v548
    %v717 = vpack.c.b16 %v557, %v549
    %v718 = vpack.c.b16 %v558, %v550
    %v719 = vpack.c.b16 %v559, %v551
    %v720 = vpack.c.b16 %v568, %v560
    %v721 = vpack.c.b16 %v569, %v561
    %v722 = vpack.c.b16 %v570, %v562
    %v723 = vpack.c.b16 %v571, %v563
    %v724 = vpack.c.b16 %v572, %v564
    %v725 = vpack.c.b16 %v573, %v565
    %v726 = vpack.c.b16 %v574, %v566
    %v727 = vpack.c.b16 %v575, %v567
    %v728 = vpack.c.b16 %v584, %v576
    %v729 = vpack.c.b16 %v585, %v577
    %v730 = vpack.c.b16 %v586, %v578
    %v731 = vpack.c.b16 %v587, %v579
    %v732 = vpack.c.b16 %v588, %v580
    %v733 = vpack.c.b16 %v589, %v581
    %v734 = vpack.c.b16 %v590, %v582
    %v735 = vpack.c.b16 %v591, %v583
    %v736 = vpack.c.b16 %v600, %v592
    %v737 = vpack.c.b16 %v601, %v593
    %v738 = vpack.c.b16 %v602, %v594
    %v739 = vpack.c.b16 %v603, %v595
    %v740 = vpack.c.b16 %v604, %v596
    %v741 = vpack.c.b16 %v605, %v597
    %v742 = vpack.c.b16 %v606, %v598
    %v743 = vpack.c.b16 %v607, %v599
    %v744 = vpack.c.b16 %v616, %v608
    %v745 = vpack.c.b16 %v617, %v609
    %v746 = vpack.c.b16 %v618, %v610
    %v747 = vpack.c.b16 %v619, %v611
    %v748 = vpack.c.b16 %v620, %v612
    %v749 = vpack.c.b16 %v621, %v613
    %v750 = vpack.c.b16 %v622, %v614
    %v751 = vpack.c.b16 %v623, %v615
    %880 = vmatpush.bf16.msra.mxu0 %v680
    %881 = vmatpush.bf16.msra.mxu0 %v672
    %882 = vmatpush.bf16.msra.mxu0 %v664
    %883 = vmatpush.bf16.msra.mxu0 %v656
    %884 = vmatpush.bf16.msra.mxu0 %v648
    %885 = vmatpush.bf16.msra.mxu0 %v640
    %886 = vmatpush.bf16.msra.mxu0 %v632
    %887 = vmatpush.bf16.msra.mxu0 %v624
    %888 = vmatmul.bf16.gmra.mxu0 %v236
    %v889 = vpop.f32.mrf.mxu0
    %v890 = vadd.f32 %v214, %v889
    %v891 = vpop.f32.mrf.mxu0
    %v892 = vadd.f32 %v214, %v891
    %893 = vdwg.mxu0
    %894 = vmatpush.bf16.msra.mxu0 %v744
    %895 = vmatpush.bf16.msra.mxu0 %v736
    %896 = vmatpush.bf16.msra.mxu0 %v728
    %897 = vmatpush.bf16.msra.mxu0 %v720
    %898 = vmatpush.bf16.msra.mxu0 %v712
    %899 = vmatpush.bf16.msra.mxu0 %v704
    %900 = vmatpush.bf16.msra.mxu0 %v696
    %901 = vmatpush.bf16.msra.mxu0 %v688
    %902 = vmatmul.bf16.gmra.mxu0 %v237
    %v903 = vpop.f32.mrf.mxu0
    %v904 = vadd.f32 %v890, %v903
    %v905 = vpop.f32.mrf.mxu0
    %v906 = vadd.f32 %v892, %v905
    %907 = vdwg.mxu0
    %908 = vmatpush.bf16.msra.mxu0 %v681
    %909 = vmatpush.bf16.msra.mxu0 %v673
    %910 = vmatpush.bf16.msra.mxu0 %v665
    %911 = vmatpush.bf16.msra.mxu0 %v657
    %912 = vmatpush.bf16.msra.mxu0 %v649
    %913 = vmatpush.bf16.msra.mxu0 %v641
    %914 = vmatpush.bf16.msra.mxu0 %v633
    %915 = vmatpush.bf16.msra.mxu0 %v625
    %916 = vmatmul.bf16.gmra.mxu0 %v236
    %v917 = vpop.f32.mrf.mxu0
    %v918 = vadd.f32 %v215, %v917
    %v919 = vpop.f32.mrf.mxu0
    %v920 = vadd.f32 %v215, %v919
    %921 = vdwg.mxu0
    %922 = vmatpush.bf16.msra.mxu0 %v745
    %923 = vmatpush.bf16.msra.mxu0 %v737
    %924 = vmatpush.bf16.msra.mxu0 %v729
    %925 = vmatpush.bf16.msra.mxu0 %v721
    %926 = vmatpush.bf16.msra.mxu0 %v713
    %927 = vmatpush.bf16.msra.mxu0 %v705
    %928 = vmatpush.bf16.msra.mxu0 %v697
    %929 = vmatpush.bf16.msra.mxu0 %v689
    %930 = vmatmul.bf16.gmra.mxu0 %v237
    %v931 = vpop.f32.mrf.mxu0
    %v932 = vadd.f32 %v918, %v931
    %v933 = vpop.f32.mrf.mxu0
    %v934 = vadd.f32 %v920, %v933
    %935 = vdwg.mxu0
    %936 = vmatpush.bf16.msra.mxu0 %v682
    %937 = vmatpush.bf16.msra.mxu0 %v674
    %938 = vmatpush.bf16.msra.mxu0 %v666
    %939 = vmatpush.bf16.msra.mxu0 %v658
    %940 = vmatpush.bf16.msra.mxu0 %v650
    %941 = vmatpush.bf16.msra.mxu0 %v642
    %942 = vmatpush.bf16.msra.mxu0 %v634
    %943 = vmatpush.bf16.msra.mxu0 %v626
    %944 = vmatmul.bf16.gmra.mxu0 %v236
    %v945 = vpop.f32.mrf.mxu0
    %v946 = vadd.f32 %v216, %v945
    %v947 = vpop.f32.mrf.mxu0
    %v948 = vadd.f32 %v216, %v947
    %949 = vdwg.mxu0
    %950 = vmatpush.bf16.msra.mxu0 %v746
    %951 = vmatpush.bf16.msra.mxu0 %v738
    %952 = vmatpush.bf16.msra.mxu0 %v730
    %953 = vmatpush.bf16.msra.mxu0 %v722
    %954 = vmatpush.bf16.msra.mxu0 %v714
    %955 = vmatpush.bf16.msra.mxu0 %v706
    %956 = vmatpush.bf16.msra.mxu0 %v698
    %957 = vmatpush.bf16.msra.mxu0 %v690
    %958 = vmatmul.bf16.gmra.mxu0 %v237
    %v959 = vpop.f32.mrf.mxu0
    %v960 = vadd.f32 %v946, %v959
    %v961 = vpop.f32.mrf.mxu0
    %v962 = vadd.f32 %v948, %v961
    %963 = vdwg.mxu0
    %964 = vmatpush.bf16.msra.mxu0 %v683
    %965 = vmatpush.bf16.msra.mxu0 %v675
    %966 = vmatpush.bf16.msra.mxu0 %v667
    %967 = vmatpush.bf16.msra.mxu0 %v659
    %968 = vmatpush.bf16.msra.mxu0 %v651
    %969 = vmatpush.bf16.msra.mxu0 %v643
    %970 = vmatpush.bf16.msra.mxu0 %v635
    %971 = vmatpush.bf16.msra.mxu0 %v627
    %972 = vmatmul.bf16.gmra.mxu0 %v236
    %v973 = vpop.f32.mrf.mxu0
    %v974 = vadd.f32 %v217, %v973
    %v975 = vpop.f32.mrf.mxu0
    %v976 = vadd.f32 %v217, %v975
    %977 = vdwg.mxu0
    %978 = vmatpush.bf16.msra.mxu0 %v747
    %979 = vmatpush.bf16.msra.mxu0 %v739
    %980 = vmatpush.bf16.msra.mxu0 %v731
    %981 = vmatpush.bf16.msra.mxu0 %v723
    %982 = vmatpush.bf16.msra.mxu0 %v715
    %983 = vmatpush.bf16.msra.mxu0 %v707
    %984 = vmatpush.bf16.msra.mxu0 %v699
    %985 = vmatpush.bf16.msra.mxu0 %v691
    %986 = vmatmul.bf16.gmra.mxu0 %v237
    %v987 = vpop.f32.mrf.mxu0
    %v988 = vadd.f32 %v974, %v987
    %v989 = vpop.f32.mrf.mxu0
    %v990 = vadd.f32 %v976, %v989
    %991 = vdwg.mxu0
    %992 = vmatpush.bf16.msra.mxu0 %v684
    %993 = vmatpush.bf16.msra.mxu0 %v676
    %994 = vmatpush.bf16.msra.mxu0 %v668
    %995 = vmatpush.bf16.msra.mxu0 %v660
    %996 = vmatpush.bf16.msra.mxu0 %v652
    %997 = vmatpush.bf16.msra.mxu0 %v644
    %998 = vmatpush.bf16.msra.mxu0 %v636
    %999 = vmatpush.bf16.msra.mxu0 %v628
    %1000 = vmatmul.bf16.gmra.mxu0 %v236
    %v1001 = vpop.f32.mrf.mxu0
    %v1002 = vadd.f32 %v218, %v1001
    %v1003 = vpop.f32.mrf.mxu0
    %v1004 = vadd.f32 %v218, %v1003
    %1005 = vdwg.mxu0
    %1006 = vmatpush.bf16.msra.mxu0 %v748
    %1007 = vmatpush.bf16.msra.mxu0 %v740
    %1008 = vmatpush.bf16.msra.mxu0 %v732
    %1009 = vmatpush.bf16.msra.mxu0 %v724
    %1010 = vmatpush.bf16.msra.mxu0 %v716
    %1011 = vmatpush.bf16.msra.mxu0 %v708
    %1012 = vmatpush.bf16.msra.mxu0 %v700
    %1013 = vmatpush.bf16.msra.mxu0 %v692
    %1014 = vmatmul.bf16.gmra.mxu0 %v237
    %v1015 = vpop.f32.mrf.mxu0
    %v1016 = vadd.f32 %v1002, %v1015
    %v1017 = vpop.f32.mrf.mxu0
    %v1018 = vadd.f32 %v1004, %v1017
    %1019 = vdwg.mxu0
    %1020 = vmatpush.bf16.msra.mxu0 %v685
    %1021 = vmatpush.bf16.msra.mxu0 %v677
    %1022 = vmatpush.bf16.msra.mxu0 %v669
    %1023 = vmatpush.bf16.msra.mxu0 %v661
    %1024 = vmatpush.bf16.msra.mxu0 %v653
    %1025 = vmatpush.bf16.msra.mxu0 %v645
    %1026 = vmatpush.bf16.msra.mxu0 %v637
    %1027 = vmatpush.bf16.msra.mxu0 %v629
    %1028 = vmatmul.bf16.gmra.mxu0 %v236
    %v1029 = vpop.f32.mrf.mxu0
    %v1030 = vadd.f32 %v219, %v1029
    %v1031 = vpop.f32.mrf.mxu0
    %v1032 = vadd.f32 %v219, %v1031
    %1033 = vdwg.mxu0
    %1034 = vmatpush.bf16.msra.mxu0 %v749
    %1035 = vmatpush.bf16.msra.mxu0 %v741
    %1036 = vmatpush.bf16.msra.mxu0 %v733
    %1037 = vmatpush.bf16.msra.mxu0 %v725
    %1038 = vmatpush.bf16.msra.mxu0 %v717
    %1039 = vmatpush.bf16.msra.mxu0 %v709
    %1040 = vmatpush.bf16.msra.mxu0 %v701
    %1041 = vmatpush.bf16.msra.mxu0 %v693
    %1042 = vmatmul.bf16.gmra.mxu0 %v237
    %v1043 = vpop.f32.mrf.mxu0
    %v1044 = vadd.f32 %v1030, %v1043
    %v1045 = vpop.f32.mrf.mxu0
    %v1046 = vadd.f32 %v1032, %v1045
    %1047 = vdwg.mxu0
    %1048 = vmatpush.bf16.msra.mxu0 %v686
    %1049 = vmatpush.bf16.msra.mxu0 %v678
    %1050 = vmatpush.bf16.msra.mxu0 %v670
    %1051 = vmatpush.bf16.msra.mxu0 %v662
    %1052 = vmatpush.bf16.msra.mxu0 %v654
    %1053 = vmatpush.bf16.msra.mxu0 %v646
    %1054 = vmatpush.bf16.msra.mxu0 %v638
    %1055 = vmatpush.bf16.msra.mxu0 %v630
    %1056 = vmatmul.bf16.gmra.mxu0 %v236
    %v1057 = vpop.f32.mrf.mxu0
    %v1058 = vadd.f32 %v220, %v1057
    %v1059 = vpop.f32.mrf.mxu0
    %v1060 = vadd.f32 %v220, %v1059
    %1061 = vdwg.mxu0
    %1062 = vmatpush.bf16.msra.mxu0 %v750
    %1063 = vmatpush.bf16.msra.mxu0 %v742
    %1064 = vmatpush.bf16.msra.mxu0 %v734
    %1065 = vmatpush.bf16.msra.mxu0 %v726
    %1066 = vmatpush.bf16.msra.mxu0 %v718
    %1067 = vmatpush.bf16.msra.mxu0 %v710
    %1068 = vmatpush.bf16.msra.mxu0 %v702
    %1069 = vmatpush.bf16.msra.mxu0 %v694
    %1070 = vmatmul.bf16.gmra.mxu0 %v237
    %v1071 = vpop.f32.mrf.mxu0
    %v1072 = vadd.f32 %v1058, %v1071
    %v1073 = vpop.f32.mrf.mxu0
    %v1074 = vadd.f32 %v1060, %v1073
    %1075 = vdwg.mxu0
    %1076 = vmatpush.bf16.msra.mxu0 %v687
    %1077 = vmatpush.bf16.msra.mxu0 %v679
    %1078 = vmatpush.bf16.msra.mxu0 %v671
    %1079 = vmatpush.bf16.msra.mxu0 %v663
    %1080 = vmatpush.bf16.msra.mxu0 %v655
    %1081 = vmatpush.bf16.msra.mxu0 %v647
    %1082 = vmatpush.bf16.msra.mxu0 %v639
    %1083 = vmatpush.bf16.msra.mxu0 %v631
    %1084 = vmatmul.bf16.gmra.mxu0 %v236
    %v1085 = vpop.f32.mrf.mxu0
    %v1086 = vadd.f32 %v221, %v1085
    %v1087 = vpop.f32.mrf.mxu0
    %v1088 = vadd.f32 %v221, %v1087
    %1089 = vdwg.mxu0
    %1090 = vmatpush.bf16.msra.mxu0 %v751
    %1091 = vmatpush.bf16.msra.mxu0 %v743
    %1092 = vmatpush.bf16.msra.mxu0 %v735
    %1093 = vmatpush.bf16.msra.mxu0 %v727
    %1094 = vmatpush.bf16.msra.mxu0 %v719
    %1095 = vmatpush.bf16.msra.mxu0 %v711
    %1096 = vmatpush.bf16.msra.mxu0 %v703
    %1097 = vmatpush.bf16.msra.mxu0 %v695
    %1098 = vmatmul.bf16.gmra.mxu0 %v237
    %v1099 = vpop.f32.mrf.mxu0
    %v1100 = vadd.f32 %v1086, %v1099
    %v1101 = vpop.f32.mrf.mxu0
    %v1102 = vadd.f32 %v1088, %v1101
    %1103 = vdwg.mxu0
    %v1104 = vmax.f32 %v904, 0.0
    %v1105 = vmax.f32 %v932, 0.0
    %v1106 = vmax.f32 %v960, 0.0
    %v1107 = vmax.f32 %v988, 0.0
    %v1108 = vmax.f32 %v1016, 0.0
    %v1109 = vmax.f32 %v1044, 0.0
    %v1110 = vmax.f32 %v1072, 0.0
    %v1111 = vmax.f32 %v1100, 0.0
    %v1112 = vmax.f32 %v906, 0.0
    %v1113 = vmax.f32 %v934, 0.0
    %v1114 = vmax.f32 %v962, 0.0
    %v1115 = vmax.f32 %v990, 0.0
    %v1116 = vmax.f32 %v1018, 0.0
    %v1117 = vmax.f32 %v1046, 0.0
    %v1118 = vmax.f32 %v1074, 0.0
    %v1119 = vmax.f32 %v1102, 0.0
    %v1120 = vpack.c.bf16 %v1112, %v1104
    %v1121 = vpack.c.bf16 %v1113, %v1105
    %v1122 = vpack.c.bf16 %v1114, %v1106
    %v1123 = vpack.c.bf16 %v1115, %v1107
    %v1124 = vpack.c.bf16 %v1116, %v1108
    %v1125 = vpack.c.bf16 %v1117, %v1109
    %v1126 = vpack.c.bf16 %v1118, %v1110
    %v1127 = vpack.c.bf16 %v1119, %v1111
    %v1128 = vld [vmem:[#allocation8] sm:$0xf]
    %v1129 = vld [vmem:[#allocation8 + $0x4] sm:$0xf]
    %v1130 = vld [vmem:[#allocation8 + $0x8] sm:$0xf]
    %v1131 = vld [vmem:[#allocation8 + $0xc] sm:$0xf]
    %v1132 = vld [vmem:[#allocation8 + $0x10] sm:$0xf]
    %v1133 = vld [vmem:[#allocation8 + $0x14] sm:$0xf]
    %v1134 = vld [vmem:[#allocation8 + $0x18] sm:$0xf]
    %v1135 = vld [vmem:[#allocation8 + $0x1c] sm:$0xf]
    %v1136 = vld [vmem:[#allocation8 + $0x20] sm:$0xf]
    %v1137 = vld [vmem:[#allocation8 + $0x24] sm:$0xf]
    %v1138 = vld [vmem:[#allocation8 + $0x28] sm:$0xf]
    %v1139 = vld [vmem:[#allocation8 + $0x2c] sm:$0xf]
    %v1140 = vld [vmem:[#allocation8 + $0x30] sm:$0xf]
    %v1141 = vld [vmem:[#allocation8 + $0x34] sm:$0xf]
    %v1142 = vld [vmem:[#allocation8 + $0x38] sm:$0xf]
    %v1143 = vld [vmem:[#allocation8 + $0x3c] sm:$0xf]
    %v1144 = vld [vmem:[#allocation8 + $0x40] sm:$0xf]
    %v1145 = vld [vmem:[#allocation8 + $0x44] sm:$0xf]
    %v1146 = vld [vmem:[#allocation8 + $0x48] sm:$0xf]
    %v1147 = vld [vmem:[#allocation8 + $0x4c] sm:$0xf]
    %v1148 = vld [vmem:[#allocation8 + $0x50] sm:$0xf]
    %v1149 = vld [vmem:[#allocation8 + $0x54] sm:$0xf]
    %v1150 = vld [vmem:[#allocation8 + $0x58] sm:$0xf]
    %v1151 = vld [vmem:[#allocation8 + $0x5c] sm:$0xf]
    %v1152 = vld [vmem:[#allocation8 + $0x60] sm:$0xf]
    %v1153 = vld [vmem:[#allocation8 + $0x64] sm:$0xf]
    %v1154 = vld [vmem:[#allocation8 + $0x68] sm:$0xf]
    %v1155 = vld [vmem:[#allocation8 + $0x6c] sm:$0xf]
    %v1156 = vld [vmem:[#allocation8 + $0x70] sm:$0xf]
    %v1157 = vld [vmem:[#allocation8 + $0x74] sm:$0xf]
    %v1158 = vld [vmem:[#allocation8 + $0x78] sm:$0xf]
    %v1159 = vld [vmem:[#allocation8 + $0x7c] sm:$0xf]
    %v1160 = vld [vmem:[#allocation8 + $0x80] sm:$0xf]
    %v1161 = vld [vmem:[#allocation8 + $0x84] sm:$0xf]
    %v1162 = vld [vmem:[#allocation8 + $0x88] sm:$0xf]
    %v1163 = vld [vmem:[#allocation8 + $0x8c] sm:$0xf]
    %v1164 = vld [vmem:[#allocation8 + $0x90] sm:$0xf]
    %v1165 = vld [vmem:[#allocation8 + $0x94] sm:$0xf]
    %v1166 = vld [vmem:[#allocation8 + $0x98] sm:$0xf]
    %v1167 = vld [vmem:[#allocation8 + $0x9c] sm:$0xf]
    %v1168 = vld [vmem:[#allocation8 + $0xa0] sm:$0xf]
    %v1169 = vld [vmem:[#allocation8 + $0xa4] sm:$0xf]
    %v1170 = vld [vmem:[#allocation8 + $0xa8] sm:$0xf]
    %v1171 = vld [vmem:[#allocation8 + $0xac] sm:$0xf]
    %v1172 = vld [vmem:[#allocation8 + $0xb0] sm:$0xf]
    %v1173 = vld [vmem:[#allocation8 + $0xb4] sm:$0xf]
    %v1174 = vld [vmem:[#allocation8 + $0xb8] sm:$0xf]
    %v1175 = vld [vmem:[#allocation8 + $0xbc] sm:$0xf]
    %v1176 = vld [vmem:[#allocation8 + $0xc0] sm:$0xf]
    %v1177 = vld [vmem:[#allocation8 + $0xc4] sm:$0xf]
    %v1178 = vld [vmem:[#allocation8 + $0xc8] sm:$0xf]
    %v1179 = vld [vmem:[#allocation8 + $0xcc] sm:$0xf]
    %v1180 = vld [vmem:[#allocation8 + $0xd0] sm:$0xf]
    %v1181 = vld [vmem:[#allocation8 + $0xd4] sm:$0xf]
    %v1182 = vld [vmem:[#allocation8 + $0xd8] sm:$0xf]
    %v1183 = vld [vmem:[#allocation8 + $0xdc] sm:$0xf]
    %v1184 = vld [vmem:[#allocation8 + $0xe0] sm:$0xf]
    %v1185 = vld [vmem:[#allocation8 + $0xe4] sm:$0xf]
    %v1186 = vld [vmem:[#allocation8 + $0xe8] sm:$0xf]
    %v1187 = vld [vmem:[#allocation8 + $0xec] sm:$0xf]
    %v1188 = vld [vmem:[#allocation8 + $0xf0] sm:$0xf]
    %v1189 = vld [vmem:[#allocation8 + $0xf4] sm:$0xf]
    %v1190 = vld [vmem:[#allocation8 + $0xf8] sm:$0xf]
    %v1191 = vld [vmem:[#allocation8 + $0xfc] sm:$0xf]
    %v1192 = vld [vmem:[#allocation8 + $0x100] sm:$0xf]
    %v1193 = vld [vmem:[#allocation8 + $0x104] sm:$0xf]
    %v1194 = vld [vmem:[#allocation8 + $0x108] sm:$0xf]
    %v1195 = vld [vmem:[#allocation8 + $0x10c] sm:$0xf]
    %v1196 = vld [vmem:[#allocation8 + $0x110] sm:$0xf]
    %v1197 = vld [vmem:[#allocation8 + $0x114] sm:$0xf]
    %v1198 = vld [vmem:[#allocation8 + $0x118] sm:$0xf]
    %v1199 = vld [vmem:[#allocation8 + $0x11c] sm:$0xf]
    %v1200 = vld [vmem:[#allocation8 + $0x120] sm:$0xf]
    %v1201 = vld [vmem:[#allocation8 + $0x124] sm:$0xf]
    %v1202 = vld [vmem:[#allocation8 + $0x128] sm:$0xf]
    %v1203 = vld [vmem:[#allocation8 + $0x12c] sm:$0xf]
    %v1204 = vld [vmem:[#allocation8 + $0x130] sm:$0xf]
    %v1205 = vld [vmem:[#allocation8 + $0x134] sm:$0xf]
    %v1206 = vld [vmem:[#allocation8 + $0x138] sm:$0xf]
    %v1207 = vld [vmem:[#allocation8 + $0x13c] sm:$0xf]
    %v1208 = vld [vmem:[#allocation8 + $0x140] sm:$0xf]
    %v1209 = vld [vmem:[#allocation8 + $0x144] sm:$0xf]
    %v1210 = vld [vmem:[#allocation8 + $0x148] sm:$0xf]
    %v1211 = vld [vmem:[#allocation8 + $0x14c] sm:$0xf]
    %v1212 = vld [vmem:[#allocation8 + $0x150] sm:$0xf]
    %v1213 = vld [vmem:[#allocation8 + $0x154] sm:$0xf]
    %v1214 = vld [vmem:[#allocation8 + $0x158] sm:$0xf]
    %v1215 = vld [vmem:[#allocation8 + $0x15c] sm:$0xf]
    %v1216 = vld [vmem:[#allocation8 + $0x160] sm:$0xf]
    %v1217 = vld [vmem:[#allocation8 + $0x164] sm:$0xf]
    %v1218 = vld [vmem:[#allocation8 + $0x168] sm:$0xf]
    %v1219 = vld [vmem:[#allocation8 + $0x16c] sm:$0xf]
    %v1220 = vld [vmem:[#allocation8 + $0x170] sm:$0xf]
    %v1221 = vld [vmem:[#allocation8 + $0x174] sm:$0xf]
    %v1222 = vld [vmem:[#allocation8 + $0x178] sm:$0xf]
    %v1223 = vld [vmem:[#allocation8 + $0x17c] sm:$0xf]
    %v1224 = vld [vmem:[#allocation8 + $0x180] sm:$0xf]
    %v1225 = vld [vmem:[#allocation8 + $0x184] sm:$0xf]
    %v1226 = vld [vmem:[#allocation8 + $0x188] sm:$0xf]
    %v1227 = vld [vmem:[#allocation8 + $0x18c] sm:$0xf]
    %v1228 = vld [vmem:[#allocation8 + $0x190] sm:$0xf]
    %v1229 = vld [vmem:[#allocation8 + $0x194] sm:$0xf]
    %v1230 = vld [vmem:[#allocation8 + $0x198] sm:$0xf]
    %v1231 = vld [vmem:[#allocation8 + $0x19c] sm:$0xf]
    %v1232 = vld [vmem:[#allocation8 + $0x1a0] sm:$0xf]
    %v1233 = vld [vmem:[#allocation8 + $0x1a4] sm:$0xf]
    %v1234 = vld [vmem:[#allocation8 + $0x1a8] sm:$0xf]
    %v1235 = vld [vmem:[#allocation8 + $0x1ac] sm:$0xf]
    %v1236 = vld [vmem:[#allocation8 + $0x1b0] sm:$0xf]
    %v1237 = vld [vmem:[#allocation8 + $0x1b4] sm:$0xf]
    %v1238 = vld [vmem:[#allocation8 + $0x1b8] sm:$0xf]
    %v1239 = vld [vmem:[#allocation8 + $0x1bc] sm:$0xf]
    %v1240 = vld [vmem:[#allocation8 + $0x1c0] sm:$0xf]
    %v1241 = vld [vmem:[#allocation8 + $0x1c4] sm:$0xf]
    %v1242 = vld [vmem:[#allocation8 + $0x1c8] sm:$0xf]
    %v1243 = vld [vmem:[#allocation8 + $0x1cc] sm:$0xf]
    %v1244 = vld [vmem:[#allocation8 + $0x1d0] sm:$0xf]
    %v1245 = vld [vmem:[#allocation8 + $0x1d4] sm:$0xf]
    %v1246 = vld [vmem:[#allocation8 + $0x1d8] sm:$0xf]
    %v1247 = vld [vmem:[#allocation8 + $0x1dc] sm:$0xf]
    %v1248 = vld [vmem:[#allocation8 + $0x1e0] sm:$0xf]
    %v1249 = vld [vmem:[#allocation8 + $0x1e4] sm:$0xf]
    %v1250 = vld [vmem:[#allocation8 + $0x1e8] sm:$0xf]
    %v1251 = vld [vmem:[#allocation8 + $0x1ec] sm:$0xf]
    %v1252 = vld [vmem:[#allocation8 + $0x1f0] sm:$0xf]
    %v1253 = vld [vmem:[#allocation8 + $0x1f4] sm:$0xf]
    %v1254 = vld [vmem:[#allocation8 + $0x1f8] sm:$0xf]
    %v1255 = vld [vmem:[#allocation8 + $0x1fc] sm:$0xf]
    %v1256 = vld [vmem:[%s4] sm:$0x1]
    %v1258 = vperm.slane %v1256, 0
    %v1388 = vunpack.c.l.b16 %v1128
    %v1389 = vunpack.c.l.b16 %v1129
    %v1390 = vunpack.c.l.b16 %v1130
    %v1391 = vunpack.c.l.b16 %v1131
    %v1392 = vunpack.c.l.b16 %v1132
    %v1393 = vunpack.c.l.b16 %v1133
    %v1394 = vunpack.c.l.b16 %v1134
    %v1395 = vunpack.c.l.b16 %v1135
    %v1396 = vunpack.c.l.b16 %v1136
    %v1397 = vunpack.c.l.b16 %v1137
    %v1398 = vunpack.c.l.b16 %v1138
    %v1399 = vunpack.c.l.b16 %v1139
    %v1400 = vunpack.c.l.b16 %v1140
    %v1401 = vunpack.c.l.b16 %v1141
    %v1402 = vunpack.c.l.b16 %v1142
    %v1403 = vunpack.c.l.b16 %v1143
    %v1404 = vunpack.c.l.b16 %v1144
    %v1405 = vunpack.c.l.b16 %v1145
    %v1406 = vunpack.c.l.b16 %v1146
    %v1407 = vunpack.c.l.b16 %v1147
    %v1408 = vunpack.c.l.b16 %v1148
    %v1409 = vunpack.c.l.b16 %v1149
    %v1410 = vunpack.c.l.b16 %v1150
    %v1411 = vunpack.c.l.b16 %v1151
    %v1412 = vunpack.c.l.b16 %v1152
    %v1413 = vunpack.c.l.b16 %v1153
    %v1414 = vunpack.c.l.b16 %v1154
    %v1415 = vunpack.c.l.b16 %v1155
    %v1416 = vunpack.c.l.b16 %v1156
    %v1417 = vunpack.c.l.b16 %v1157
    %v1418 = vunpack.c.l.b16 %v1158
    %v1419 = vunpack.c.l.b16 %v1159
    %v1420 = vunpack.c.l.b16 %v1160
    %v1421 = vunpack.c.l.b16 %v1161
    %v1422 = vunpack.c.l.b16 %v1162
    %v1423 = vunpack.c.l.b16 %v1163
    %v1424 = vunpack.c.l.b16 %v1164
    %v1425 = vunpack.c.l.b16 %v1165
    %v1426 = vunpack.c.l.b16 %v1166
    %v1427 = vunpack.c.l.b16 %v1167
    %v1428 = vunpack.c.l.b16 %v1168
    %v1429 = vunpack.c.l.b16 %v1169
    %v1430 = vunpack.c.l.b16 %v1170
    %v1431 = vunpack.c.l.b16 %v1171
    %v1432 = vunpack.c.l.b16 %v1172
    %v1433 = vunpack.c.l.b16 %v1173
    %v1434 = vunpack.c.l.b16 %v1174
    %v1435 = vunpack.c.l.b16 %v1175
    %v1436 = vunpack.c.l.b16 %v1176
    %v1437 = vunpack.c.l.b16 %v1177
    %v1438 = vunpack.c.l.b16 %v1178
    %v1439 = vunpack.c.l.b16 %v1179
    %v1440 = vunpack.c.l.b16 %v1180
    %v1441 = vunpack.c.l.b16 %v1181
    %v1442 = vunpack.c.l.b16 %v1182
    %v1443 = vunpack.c.l.b16 %v1183
    %v1444 = vunpack.c.l.b16 %v1184
    %v1445 = vunpack.c.l.b16 %v1185
    %v1446 = vunpack.c.l.b16 %v1186
    %v1447 = vunpack.c.l.b16 %v1187
    %v1448 = vunpack.c.l.b16 %v1188
    %v1449 = vunpack.c.l.b16 %v1189
    %v1450 = vunpack.c.l.b16 %v1190
    %v1451 = vunpack.c.l.b16 %v1191
    %v1452 = vunpack.c.l.b16 %v1192
    %v1453 = vunpack.c.l.b16 %v1193
    %v1454 = vunpack.c.l.b16 %v1194
    %v1455 = vunpack.c.l.b16 %v1195
    %v1456 = vunpack.c.l.b16 %v1196
    %v1457 = vunpack.c.l.b16 %v1197
    %v1458 = vunpack.c.l.b16 %v1198
    %v1459 = vunpack.c.l.b16 %v1199
    %v1460 = vunpack.c.l.b16 %v1200
    %v1461 = vunpack.c.l.b16 %v1201
    %v1462 = vunpack.c.l.b16 %v1202
    %v1463 = vunpack.c.l.b16 %v1203
    %v1464 = vunpack.c.l.b16 %v1204
    %v1465 = vunpack.c.l.b16 %v1205
    %v1466 = vunpack.c.l.b16 %v1206
    %v1467 = vunpack.c.l.b16 %v1207
    %v1468 = vunpack.c.l.b16 %v1208
    %v1469 = vunpack.c.l.b16 %v1209
    %v1470 = vunpack.c.l.b16 %v1210
    %v1471 = vunpack.c.l.b16 %v1211
    %v1472 = vunpack.c.l.b16 %v1212
    %v1473 = vunpack.c.l.b16 %v1213
    %v1474 = vunpack.c.l.b16 %v1214
    %v1475 = vunpack.c.l.b16 %v1215
    %v1476 = vunpack.c.l.b16 %v1216
    %v1477 = vunpack.c.l.b16 %v1217
    %v1478 = vunpack.c.l.b16 %v1218
    %v1479 = vunpack.c.l.b16 %v1219
    %v1480 = vunpack.c.l.b16 %v1220
    %v1481 = vunpack.c.l.b16 %v1221
    %v1482 = vunpack.c.l.b16 %v1222
    %v1483 = vunpack.c.l.b16 %v1223
    %v1484 = vunpack.c.l.b16 %v1224
    %v1485 = vunpack.c.l.b16 %v1225
    %v1486 = vunpack.c.l.b16 %v1226
    %v1487 = vunpack.c.l.b16 %v1227
    %v1488 = vunpack.c.l.b16 %v1228
    %v1489 = vunpack.c.l.b16 %v1229
    %v1490 = vunpack.c.l.b16 %v1230
    %v1491 = vunpack.c.l.b16 %v1231
    %v1492 = vunpack.c.l.b16 %v1232
    %v1493 = vunpack.c.l.b16 %v1233
    %v1494 = vunpack.c.l.b16 %v1234
    %v1495 = vunpack.c.l.b16 %v1235
    %v1496 = vunpack.c.l.b16 %v1236
    %v1497 = vunpack.c.l.b16 %v1237
    %v1498 = vunpack.c.l.b16 %v1238
    %v1499 = vunpack.c.l.b16 %v1239
    %v1500 = vunpack.c.l.b16 %v1240
    %v1501 = vunpack.c.l.b16 %v1241
    %v1502 = vunpack.c.l.b16 %v1242
    %v1503 = vunpack.c.l.b16 %v1243
    %v1504 = vunpack.c.l.b16 %v1244
    %v1505 = vunpack.c.l.b16 %v1245
    %v1506 = vunpack.c.l.b16 %v1246
    %v1507 = vunpack.c.l.b16 %v1247
    %v1508 = vunpack.c.l.b16 %v1248
    %v1509 = vunpack.c.l.b16 %v1249
    %v1510 = vunpack.c.l.b16 %v1250
    %v1511 = vunpack.c.l.b16 %v1251
    %v1512 = vunpack.c.l.b16 %v1252
    %v1513 = vunpack.c.l.b16 %v1253
    %v1514 = vunpack.c.l.b16 %v1254
    %v1515 = vunpack.c.l.b16 %v1255
    %v1516 = vpack.c.b16 %v1389, %v1388
    %v1517 = vpack.c.b16 %v1391, %v1390
    %v1518 = vpack.c.b16 %v1393, %v1392
    %v1519 = vpack.c.b16 %v1395, %v1394
    %v1520 = vpack.c.b16 %v1397, %v1396
    %v1521 = vpack.c.b16 %v1399, %v1398
    %v1522 = vpack.c.b16 %v1401, %v1400
    %v1523 = vpack.c.b16 %v1403, %v1402
    %v1524 = vpack.c.b16 %v1405, %v1404
    %v1525 = vpack.c.b16 %v1407, %v1406
    %v1526 = vpack.c.b16 %v1409, %v1408
    %v1527 = vpack.c.b16 %v1411, %v1410
    %v1528 = vpack.c.b16 %v1413, %v1412
    %v1529 = vpack.c.b16 %v1415, %v1414
    %v1530 = vpack.c.b16 %v1417, %v1416
    %v1531 = vpack.c.b16 %v1419, %v1418
    %v1532 = vpack.c.b16 %v1421, %v1420
    %v1533 = vpack.c.b16 %v1423, %v1422
    %v1534 = vpack.c.b16 %v1425, %v1424
    %v1535 = vpack.c.b16 %v1427, %v1426
    %v1536 = vpack.c.b16 %v1429, %v1428
    %v1537 = vpack.c.b16 %v1431, %v1430
    %v1538 = vpack.c.b16 %v1433, %v1432
    %v1539 = vpack.c.b16 %v1435, %v1434
    %v1540 = vpack.c.b16 %v1437, %v1436
    %v1541 = vpack.c.b16 %v1439, %v1438
    %v1542 = vpack.c.b16 %v1441, %v1440
    %v1543 = vpack.c.b16 %v1443, %v1442
    %v1544 = vpack.c.b16 %v1445, %v1444
    %v1545 = vpack.c.b16 %v1447, %v1446
    %v1546 = vpack.c.b16 %v1449, %v1448
    %v1547 = vpack.c.b16 %v1451, %v1450
    %v1548 = vpack.c.b16 %v1453, %v1452
    %v1549 = vpack.c.b16 %v1455, %v1454
    %v1550 = vpack.c.b16 %v1457, %v1456
    %v1551 = vpack.c.b16 %v1459, %v1458
    %v1552 = vpack.c.b16 %v1461, %v1460
    %v1553 = vpack.c.b16 %v1463, %v1462
    %v1554 = vpack.c.b16 %v1465, %v1464
    %v1555 = vpack.c.b16 %v1467, %v1466
    %v1556 = vpack.c.b16 %v1469, %v1468
    %v1557 = vpack.c.b16 %v1471, %v1470
    %v1558 = vpack.c.b16 %v1473, %v1472
    %v1559 = vpack.c.b16 %v1475, %v1474
    %v1560 = vpack.c.b16 %v1477, %v1476
    %v1561 = vpack.c.b16 %v1479, %v1478
    %v1562 = vpack.c.b16 %v1481, %v1480
    %v1563 = vpack.c.b16 %v1483, %v1482
    %v1564 = vpack.c.b16 %v1485, %v1484
    %v1565 = vpack.c.b16 %v1487, %v1486
    %v1566 = vpack.c.b16 %v1489, %v1488
    %v1567 = vpack.c.b16 %v1491, %v1490
    %v1568 = vpack.c.b16 %v1493, %v1492
    %v1569 = vpack.c.b16 %v1495, %v1494
    %v1570 = vpack.c.b16 %v1497, %v1496
    %v1571 = vpack.c.b16 %v1499, %v1498
    %v1572 = vpack.c.b16 %v1501, %v1500
    %v1573 = vpack.c.b16 %v1503, %v1502
    %v1574 = vpack.c.b16 %v1505, %v1504
    %v1575 = vpack.c.b16 %v1507, %v1506
    %v1576 = vpack.c.b16 %v1509, %v1508
    %v1577 = vpack.c.b16 %v1511, %v1510
    %v1578 = vpack.c.b16 %v1513, %v1512
    %v1579 = vpack.c.b16 %v1515, %v1514
    %1644 = vmatpush.bf16.msra.mxu0 %v1523
    %1645 = vmatpush.bf16.msra.mxu0 %v1522
    %1646 = vmatpush.bf16.msra.mxu0 %v1521
    %1647 = vmatpush.bf16.msra.mxu0 %v1520
    %1648 = vmatpush.bf16.msra.mxu0 %v1519
    %1649 = vmatpush.bf16.msra.mxu0 %v1518
    %1650 = vmatpush.bf16.msra.mxu0 %v1517
    %1651 = vmatpush.bf16.msra.mxu0 %v1516
    %1652 = vmatmul.bf16.gmra.mxu0 %v1120
    %v1653 = vpop.f32.mrf.mxu0
    %v1654 = vadd.f32 %v1258, %v1653
    %v1655 = vpop.f32.mrf.mxu0
    %v1656 = vadd.f32 %v1258, %v1655
    %1657 = vdwg.mxu0
    %1658 = vmatpush.bf16.msra.mxu0 %v1531
    %1659 = vmatpush.bf16.msra.mxu0 %v1530
    %1660 = vmatpush.bf16.msra.mxu0 %v1529
    %1661 = vmatpush.bf16.msra.mxu0 %v1528
    %1662 = vmatpush.bf16.msra.mxu0 %v1527
    %1663 = vmatpush.bf16.msra.mxu0 %v1526
    %1664 = vmatpush.bf16.msra.mxu0 %v1525
    %1665 = vmatpush.bf16.msra.mxu0 %v1524
    %1666 = vmatmul.bf16.gmra.mxu0 %v1121
    %v1667 = vpop.f32.mrf.mxu0
    %v1668 = vadd.f32 %v1654, %v1667
    %v1669 = vpop.f32.mrf.mxu0
    %v1670 = vadd.f32 %v1656, %v1669
    %1671 = vdwg.mxu0
    %1672 = vmatpush.bf16.msra.mxu0 %v1539
    %1673 = vmatpush.bf16.msra.mxu0 %v1538
    %1674 = vmatpush.bf16.msra.mxu0 %v1537
    %1675 = vmatpush.bf16.msra.mxu0 %v1536
    %1676 = vmatpush.bf16.msra.mxu0 %v1535
    %1677 = vmatpush.bf16.msra.mxu0 %v1534
    %1678 = vmatpush.bf16.msra.mxu0 %v1533
    %1679 = vmatpush.bf16.msra.mxu0 %v1532
    %1680 = vmatmul.bf16.gmra.mxu0 %v1122
    %v1681 = vpop.f32.mrf.mxu0
    %v1682 = vadd.f32 %v1668, %v1681
    %v1683 = vpop.f32.mrf.mxu0
    %v1684 = vadd.f32 %v1670, %v1683
    %1685 = vdwg.mxu0
    %1686 = vmatpush.bf16.msra.mxu0 %v1547
    %1687 = vmatpush.bf16.msra.mxu0 %v1546
    %1688 = vmatpush.bf16.msra.mxu0 %v1545
    %1689 = vmatpush.bf16.msra.mxu0 %v1544
    %1690 = vmatpush.bf16.msra.mxu0 %v1543
    %1691 = vmatpush.bf16.msra.mxu0 %v1542
    %1692 = vmatpush.bf16.msra.mxu0 %v1541
    %1693 = vmatpush.bf16.msra.mxu0 %v1540
    %1694 = vmatmul.bf16.gmra.mxu0 %v1123
    %v1695 = vpop.f32.mrf.mxu0
    %v1696 = vadd.f32 %v1682, %v1695
    %v1697 = vpop.f32.mrf.mxu0
    %v1698 = vadd.f32 %v1684, %v1697
    %1699 = vdwg.mxu0
    %1700 = vmatpush.bf16.msra.mxu0 %v1555
    %1701 = vmatpush.bf16.msra.mxu0 %v1554
    %1702 = vmatpush.bf16.msra.mxu0 %v1553
    %1703 = vmatpush.bf16.msra.mxu0 %v1552
    %1704 = vmatpush.bf16.msra.mxu0 %v1551
    %1705 = vmatpush.bf16.msra.mxu0 %v1550
    %1706 = vmatpush.bf16.msra.mxu0 %v1549
    %1707 = vmatpush.bf16.msra.mxu0 %v1548
    %1708 = vmatmul.bf16.gmra.mxu0 %v1124
    %v1709 = vpop.f32.mrf.mxu0
    %v1710 = vadd.f32 %v1696, %v1709
    %v1711 = vpop.f32.mrf.mxu0
    %v1712 = vadd.f32 %v1698, %v1711
    %1713 = vdwg.mxu0
    %1714 = vmatpush.bf16.msra.mxu0 %v1563
    %1715 = vmatpush.bf16.msra.mxu0 %v1562
    %1716 = vmatpush.bf16.msra.mxu0 %v1561
    %1717 = vmatpush.bf16.msra.mxu0 %v1560
    %1718 = vmatpush.bf16.msra.mxu0 %v1559
    %1719 = vmatpush.bf16.msra.mxu0 %v1558
    %1720 = vmatpush.bf16.msra.mxu0 %v1557
    %1721 = vmatpush.bf16.msra.mxu0 %v1556
    %1722 = vmatmul.bf16.gmra.mxu0 %v1125
    %v1723 = vpop.f32.mrf.mxu0
    %v1724 = vadd.f32 %v1710, %v1723
    %v1725 = vpop.f32.mrf.mxu0
    %v1726 = vadd.f32 %v1712, %v1725
    %1727 = vdwg.mxu0
    %1728 = vmatpush.bf16.msra.mxu0 %v1571
    %1729 = vmatpush.bf16.msra.mxu0 %v1570
    %1730 = vmatpush.bf16.msra.mxu0 %v1569
    %1731 = vmatpush.bf16.msra.mxu0 %v1568
    %1732 = vmatpush.bf16.msra.mxu0 %v1567
    %1733 = vmatpush.bf16.msra.mxu0 %v1566
    %1734 = vmatpush.bf16.msra.mxu0 %v1565
    %1735 = vmatpush.bf16.msra.mxu0 %v1564
    %1736 = vmatmul.bf16.gmra.mxu0 %v1126
    %v1737 = vpop.f32.mrf.mxu0
    %v1738 = vadd.f32 %v1724, %v1737
    %v1739 = vpop.f32.mrf.mxu0
    %v1740 = vadd.f32 %v1726, %v1739
    %1741 = vdwg.mxu0
    %1742 = vmatpush.bf16.msra.mxu0 %v1579
    %1743 = vmatpush.bf16.msra.mxu0 %v1578
    %1744 = vmatpush.bf16.msra.mxu0 %v1577
    %1745 = vmatpush.bf16.msra.mxu0 %v1576
    %1746 = vmatpush.bf16.msra.mxu0 %v1575
    %1747 = vmatpush.bf16.msra.mxu0 %v1574
    %1748 = vmatpush.bf16.msra.mxu0 %v1573
    %1749 = vmatpush.bf16.msra.mxu0 %v1572
    %1750 = vmatmul.bf16.gmra.mxu0 %v1127
    %v1751 = vpop.f32.mrf.mxu0
    %v1752 = vadd.f32 %v1738, %v1751
    %v1753 = vpop.f32.mrf.mxu0
    %v1754 = vadd.f32 %v1740, %v1753
    %1755 = vdwg.mxu0
    %1756 = vst [vmem:[#allocation10] sm:$0xff] %v1752
    %1757 = vst [vmem:[#allocation10 + $0x8] sm:$0xff] %v1754
    // Predicated region
    $region38: #{tpu_custom_call.1} parent=1 // pred_check
      _
    $region39: #{tpu_custom_call.1} parent=1 // pred_check_branch
      %1759 = sbr.rel (0) target = $region41
    $region40: #{tpu_custom_call.1} parent=1 // pred_region
      %1761 = vsyncadd [#allocation4], 0
      %s1762 = sshll.u32 [#allocation10], 4
      %s1763 = int_to_ptr.vmem [resolvable:$true] %s1762
      %s1764 = sshll.u32 %s5, 4
      %s1765 = int_to_ptr.hbm [resolvable:$true] %s1764
      %1770 = dma.vmem_to_hbm [thread:$0]  %s1763, 256, %s1765, [#allocation4], 128, 128, 8
    $region41: #{tpu_custom_call.1} parent=1 // pred_fallthru
      _
    // Predicated region
    $region42: #{tpu_custom_call.1} parent=1 // pred_check
      _
    $region43: #{tpu_custom_call.1} parent=1 // pred_check_branch
      %1772 = sbr.rel (0) target = $region45
    $region44: #{tpu_custom_call.1} parent=1 // pred_region
      %1774 = dma.done [#allocation4], 256
    $region45: #{tpu_custom_call.1} parent=1 // pred_fallthru
      _
    %1775 = vsyncpa [#allocation3], 1
    %1776 = vsyncpa [#allocation6], 1
    %1777 = vsyncpa [#allocation9], 1
    %1778 = vsyncpa [#allocation4], 1

</llo_original>
